<compile_context>
chip_gen: v7x
topology: tpu7x:2x2x1
jax: 0.10.0
libtpu: 0.0.40
codegen_flags: <defaults>
</compile_context>

<pallas_src>
import functools

import jax
import jax.numpy as jnp
from jax import lax
from jax.experimental import pallas as pl
from jax.experimental.pallas import tpu as pltpu

EPS = 1e-5
MXU_DTYPE = jnp.float32   # jnp.bfloat16 -> ~2-3x MXU throughput (re-validate vs 2e-3)
ACT_DTYPE = jnp.float32   # jnp.bfloat16 -> ~2x less inter-pass HBM traffic


def _vmem_limit_bytes():
    """Generation-dependent VMEM cap: ~3/4 of physical, capped at 100 MiB."""
    cap = 128 << 20
    try:
        cap = int(getattr(pltpu.get_tpu_info(), "vmem_capacity_bytes", 0)) or cap
    except Exception:
        pass
    return int(min(cap * 3 // 4, 100 << 20))


# ----------------------------- kernel helpers --------------------------------

def _conv3x3(pad_ref, w_ref, hp, wp, cin):
    """3x3 'SAME' conv on a zero-padded (hp+2, wp+2, cin) VMEM scratch.
    Nine thin (M, cin) @ (cin, cout) MXU dots accumulated in f32 -- no
    materialized (M, 9*cin) im2col temp."""
    cout = w_ref.shape[3]
    acc = jnp.zeros((hp * wp, cout), jnp.float32)
    for ky in range(3):
        for kx in range(3):
            tap = pad_ref[ky:ky + hp, kx:kx + wp, :].reshape(hp * wp, cin)
            acc = acc + jnp.dot(tap.astype(MXU_DTYPE),
                                w_ref[ky, kx].astype(MXU_DTYPE),
                                preferred_element_type=jnp.float32)
    return acc


def _accumulate_stats(y, sum_ref, ssq_ref, is_first):
    """Single-pass BN partials (sum, sum-of-squares) accumulated into a resident
    per-core (1, 1, C) output block across the local ("arbitrary") grid axis."""
    @pl.when(is_first)
    def _():
        sum_ref[...] = jnp.zeros_like(sum_ref)
        ssq_ref[...] = jnp.zeros_like(ssq_ref)

    sum_ref[0] += jnp.sum(y, axis=0, keepdims=True)
    ssq_ref[0] += jnp.sum(y * y, axis=0, keepdims=True)


def _bn_scale_shift(sum_ref, ssq_ref, g_ref, b_ref, inv_count):
    """Fold global batch stats + affine params into per-channel scale/shift."""
    mean = sum_ref[...] * inv_count
    var = ssq_ref[...] * inv_count - mean * mean        # E[x^2] - mean^2
    scale = g_ref[...] * lax.rsqrt(var + EPS)
    shift = b_ref[...] - mean * scale
    return scale, shift


# ------------------------------- kernels --------------------------------------

def _pool_conv1_kernel(x_ref, w1_ref, y1_ref, sum1_ref, ssq1_ref, pad1_ref,
                       *, hp, wp, cin):
    i = pl.program_id(1)          # local step along this core's "arbitrary" axis

    # Zero the padded scratch on each core's first local iteration; the 1-pixel
    # halo then stays zero across steps while the interior is fully rewritten.
    @pl.when(i == 0)
    def _():
        pad1_ref[...] = jnp.zeros_like(pad1_ref)

    # MaxPool2d(kernel=2, stride=2): max of the four stride-2 phases.
    p00 = x_ref[:, pl.ds(0, hp, 2), pl.ds(0, wp, 2), :]
    p01 = x_ref[:, pl.ds(0, hp, 2), pl.ds(1, wp, 2), :]
    p10 = x_ref[:, pl.ds(1, hp, 2), pl.ds(0, wp, 2), :]
    p11 = x_ref[:, pl.ds(1, hp, 2), pl.ds(1, wp, 2), :]
    pooled = jnp.maximum(jnp.maximum(p00, p01), jnp.maximum(p10, p11))

    pad1_ref[1:hp + 1, 1:wp + 1, :] = pooled.reshape(hp, wp, cin)

    y1 = _conv3x3(pad1_ref, w1_ref, hp, wp, cin)          # (M, cmid) f32
    y1_ref[0] = y1.astype(y1_ref.dtype)
    _accumulate_stats(y1, sum1_ref, ssq1_ref, i == 0)


def _bn1_conv2_kernel(y1_ref, s1_ref, q1_ref, g1_ref, b1_ref, w2_ref,
                      y2_ref, sum2_ref, ssq2_ref, pad2_ref,
                      *, hp, wp, cmid, inv_count):
    i = pl.program_id(1)

    @pl.when(i == 0)
    def _():
        pad2_ref[...] = jnp.zeros_like(pad2_ref)

    # BN1 (global stats from pass 1) + ReLU, written straight into the interior
    # of conv2's padded scratch (no extra materialized mid activation).
    scale, shift = _bn_scale_shift(s1_ref, q1_ref, g1_ref, b1_ref, inv_count)
    h = jnp.maximum(y1_ref[0].astype(jnp.float32) * scale + shift, 0.0)
    pad2_ref[1:hp + 1, 1:wp + 1, :] = h.reshape(hp, wp, cmid)

    y2 = _conv3x3(pad2_ref, w2_ref, hp, wp, cmid)         # (M, cout) f32
    y2_ref[0] = y2.astype(y2_ref.dtype)
    _accumulate_stats(y2, sum2_ref, ssq2_ref, i == 0)


def _bn2_relu_kernel(y2_ref, s2_ref, q2_ref, g2_ref, b2_ref, o_ref,
                     *, inv_count, bt):
    scale, shift = _bn_scale_shift(s2_ref, q2_ref, g2_ref, b2_ref, inv_count)
    for b in range(bt):   # static unrolled, bt is small
        h = jnp.maximum(y2_ref[b].astype(jnp.float32) * scale + shift, 0.0)
        o_ref[b] = h.T.astype(o_ref.dtype)   # (cout, m): NCHW layout, lane-dense in m


# ------------------------------- wrapper ---------------------------------------

def down_forward(x_nchw, w1, g1, b1, w2, g2, b2):
    """x_nchw: (N, Cin, H, W).  w1: (3,3,Cin,Cmid), w2: (3,3,Cmid,Cout) in HWIO.
    g*/b*: (1, C) BatchNorm affine params.  Returns (N, Cout, H//2, W//2)."""
    x = jnp.transpose(x_nchw, (0, 2, 3, 1)).astype(jnp.float32)  # NCHW -> NHWC
    n, h, w, cin = x.shape
    hp, wp = h // 2, w // 2
    m = hp * wp
    cmid = w1.shape[3]
    cout = w2.shape[3]
    inv_count = 1.0 / float(n * m)      # BN stats over all of (N, Hp, Wp)

    w1f = w1.astype(jnp.float32)        # (3, 3, cin,  cmid)
    w2f = w2.astype(jnp.float32)        # (3, 3, cmid, cout)

    vmem_limit = _vmem_limit_bytes()

    # megacore: split the batch over (up to) 2 cores on the matmul-heavy passes
    nc = 2 if (n >= 2 and n % 2 == 0) else 1
    chunk = n // nc

    def full(shape):
        nd = len(shape)
        return pl.BlockSpec(shape, lambda *_: (0,) * nd)

    mm_params = pltpu.CompilerParams(
        dimension_semantics=("parallel", "arbitrary"),
        vmem_limit_bytes=vmem_limit)
    ew_params = pltpu.CompilerParams(
        dimension_semantics=("parallel",),
        vmem_limit_bytes=vmem_limit)

    # ---- pass 1: maxpool + conv1, per-core BN1 partial stats ------------------
    y1, s1p, q1p = pl.pallas_call(
        functools.partial(_pool_conv1_kernel, hp=hp, wp=wp, cin=cin),
        grid=(nc, chunk),
        in_specs=[
            pl.BlockSpec((1, h, w, cin), lambda p, i: (p * chunk + i, 0, 0, 0)),
            full((3, 3, cin, cmid)),
        ],
        out_specs=(
            pl.BlockSpec((1, m, cmid), lambda p, i: (p * chunk + i, 0, 0)),
            pl.BlockSpec((1, 1, cmid), lambda p, i: (p, 0, 0)),
            pl.BlockSpec((1, 1, cmid), lambda p, i: (p, 0, 0)),
        ),
        out_shape=(
            jax.ShapeDtypeStruct((n, m, cmid), ACT_DTYPE),     # conv1 pre-act
            jax.ShapeDtypeStruct((nc, 1, cmid), jnp.float32),  # per-core sum
            jax.ShapeDtypeStruct((nc, 1, cmid), jnp.float32),  # per-core sumsq
        ),
        scratch_shapes=[pltpu.VMEM((hp + 2, wp + 2, cin), jnp.float32)],
        compiler_params=mm_params,
    )(x, w1f)
    s1 = jnp.sum(s1p, axis=0)   # (1, cmid) global BN1 stats (tiny wrapper reduce)
    q1 = jnp.sum(q1p, axis=0)

    # ---- pass 2: BN1 + ReLU + conv2, per-core BN2 partial stats ----------------
    y2, s2p, q2p = pl.pallas_call(
        functools.partial(_bn1_conv2_kernel, hp=hp, wp=wp, cmid=cmid,
                          inv_count=inv_count),
        grid=(nc, chunk),
        in_specs=[
            pl.BlockSpec((1, m, cmid), lambda p, i: (p * chunk + i, 0, 0)),
            full((1, cmid)), full((1, cmid)), full((1, cmid)), full((1, cmid)),
            full((3, 3, cmid, cout)),
        ],
        out_specs=(
            pl.BlockSpec((1, m, cout), lambda p, i: (p * chunk + i, 0, 0)),
            pl.BlockSpec((1, 1, cout), lambda p, i: (p, 0, 0)),
            pl.BlockSpec((1, 1, cout), lambda p, i: (p, 0, 0)),
        ),
        out_shape=(
            jax.ShapeDtypeStruct((n, m, cout), ACT_DTYPE),
            jax.ShapeDtypeStruct((nc, 1, cout), jnp.float32),
            jax.ShapeDtypeStruct((nc, 1, cout), jnp.float32),
        ),
        scratch_shapes=[pltpu.VMEM((hp + 2, wp + 2, cmid), jnp.float32)],
        compiler_params=mm_params,
    )(y1, s1, q1, g1, b1, w2f)
    s2 = jnp.sum(s2p, axis=0)
    q2 = jnp.sum(q2p, axis=0)

    # ---- pass 3: BN2 + ReLU + fused NHWC->NCHW, several images per step --------
    bt = 1
    for cand in range(min(n, 8), 0, -1):
        if n % cand == 0 and cand * m * cout * 4 * 4 <= (8 << 20):
            bt = cand
            break

    out = pl.pallas_call(
        functools.partial(_bn2_relu_kernel, inv_count=inv_count, bt=bt),
        grid=(n // bt,),
        in_specs=[
            pl.BlockSpec((bt, m, cout), lambda i: (i, 0, 0)),
            full((1, cout)), full((1, cout)), full((1, cout)), full((1, cout)),
        ],
        out_specs=pl.BlockSpec((bt, cout, m), lambda i: (i, 0, 0)),
        out_shape=jax.ShapeDtypeStruct((n, cout, m), jnp.float32),
        compiler_params=ew_params,
    )(y2, s2, q2, g2, b2)

    return out.reshape(n, cout, hp, wp)   # metadata-only split of the last dim


# ------------------------------ params / reference -----------------------------

def init_down_params(key, in_channels, out_channels):
    mid = out_channels  # DoubleConv default: mid_channels = out_channels
    k1, k2 = jax.random.split(key)

    def kaiming(k, cin, cout):
        # kaiming_normal_(mode='fan_in', nonlinearity='relu') -> std = sqrt(2/fan_in)
        fan_in = cin * 3 * 3
        std = (2.0 / fan_in) ** 0.5
        return jax.random.normal(k, (3, 3, cin, cout), jnp.float32) * std  # HWIO

    w1 = kaiming(k1, in_channels, mid)
    w2 = kaiming(k2, mid, out_channels)
    g1 = jnp.ones((1, mid), jnp.float32)
    b1 = jnp.zeros((1, mid), jnp.float32)
    g2 = jnp.ones((1, out_channels), jnp.float32)
    b2 = jnp.zeros((1, out_channels), jnp.float32)
    return w1, g1, b1, w2, g2, b2


def down_reference(x_nchw, w1, g1, b1, w2, g2, b2):
    # Pure-JAX reference (matches PyTorch Down in training mode).
    x = jnp.transpose(x_nchw, (0, 2, 3, 1)).astype(jnp.float32)
    pooled = lax.reduce_window(x, -jnp.inf, lax.max, (1, 2, 2, 1), (1, 2, 2, 1),
                               'VALID')

    def block(hin, w, g, b):
        y = lax.conv_general_dilated(hin, w, (1, 1), 'SAME',
                                     dimension_numbers=('NHWC', 'HWIO', 'NHWC'),
                                     precision=lax.Precision.HIGHEST)
        mean = jnp.mean(y, axis=(0, 1, 2), keepdims=True)
        var = jnp.mean((y - mean) ** 2, axis=(0, 1, 2), keepdims=True)
        yhat = (y - mean) * lax.rsqrt(var + EPS)
        return jnp.maximum(yhat * g.reshape(1, 1, 1, -1) + b.reshape(1, 1, 1, -1),
                           0.0)

    h1 = block(pooled, w1, g1, b1)
    h2 = block(h1, w2, g2, b2)
    return jnp.transpose(h2, (0, 3, 1, 2))


if __name__ == "__main__":
    key = jax.random.PRNGKey(0)
    kx, kp = jax.random.split(key)
    in_channels, out_channels = 4, 8
    x = jax.random.normal(kx, (2, in_channels, 16, 16), jnp.float32)  # NCHW
    params = init_down_params(kp, in_channels, out_channels)

    out = down_forward(x, *params)
    jax.block_until_ready(out)

    ref = down_reference(x, *params)
    assert out.shape == (2, out_channels, 8, 8), out.shape
    err = float(jnp.max(jnp.abs(out - ref)))
    assert jnp.allclose(out, ref, rtol=2e-3, atol=2e-3), f"max abs err = {err}"
    print("KERNEL_OK")
</pallas_src>

<mosaic_0001>
module attributes {stable_mosaic.version = 11 : i64} {
  func.func @_pool_conv1_kernel(%arg0: i32, %arg1: i32, %arg2: memref<1x16x16x4xf32, #tpu.memory_space<vmem>>, %arg3: memref<3x3x4x8xf32, #tpu.memory_space<vmem>>, %arg4: memref<1x64x8xf32, #tpu.memory_space<vmem>>, %arg5: memref<1x1x8xf32, #tpu.memory_space<vmem>>, %arg6: memref<1x1x8xf32, #tpu.memory_space<vmem>>, %arg7: memref<10x10x4xf32, #tpu.memory_space<vmem>>) attributes {dimension_semantics = [#tpu.dimension_semantics<parallel>, #tpu.dimension_semantics<arbitrary>], iteration_bounds = array<i64: 2, 1>, scalar_prefetch = 0 : i64, scratch_operands = 1 : i64, tpu.core_type = #tpu.core_type<tc>, window_params = [{transform_indices = @transform_0, window_bounds = array<i64: 1, 16, 16, 4>}, {pipeline_mode = #tpu.pipeline_mode<synchronous>, transform_indices = @transform_1, window_bounds = array<i64: 3, 3, 4, 8>}, {transform_indices = @transform_2, window_bounds = array<i64: 1, 64, 8>}, {transform_indices = @transform_3, window_bounds = array<i64: 1, 1, 8>}, {transform_indices = @transform_4, window_bounds = array<i64: 1, 1, 8>}]} {
    %c0_i32 = arith.constant 0 : i32
    %0 = arith.cmpi eq, %arg1, %c0_i32 : i32
    %1 = arith.extui %0 : i1 to i32
    %c0_i32_0 = arith.constant 0 : i32
    %2 = arith.cmpi ne, %1, %c0_i32_0 : i32
    scf.if %2 {
      %cst_108 = arith.constant 0.000000e+00 : f32
      %90 = vector.broadcast %cst_108 : f32 to vector<10x10x4xf32>
      %c0_109 = arith.constant 0 : index
      %c0_110 = arith.constant 0 : index
      %c0_111 = arith.constant 0 : index
      %91 = vector.load %arg7[%c0_109, %c0_110, %c0_111] : memref<10x10x4xf32, #tpu.memory_space<vmem>>, vector<10x10x4xf32>
      tpu.vector_store %arg7[%c0_109, %c0_110, %c0_111], %90 {strides = array<i32>} : memref<10x10x4xf32, #tpu.memory_space<vmem>>, vector<10x10x4xf32>,
    } else {
    }
    %c0 = arith.constant 0 : index
    %c0_1 = arith.constant 0 : index
    %c0_2 = arith.constant 0 : index
    %c0_3 = arith.constant 0 : index
    %3 = tpu.strided_load %arg2[%c0, %c0_1, %c0_2, %c0_3] {strides = array<i32: 1, 2, 2, 1>} : memref<1x16x16x4xf32, #tpu.memory_space<vmem>>, vector<1x8x8x4xf32>
    %c0_4 = arith.constant 0 : index
    %c0_5 = arith.constant 0 : index
    %c1 = arith.constant 1 : index
    %c0_6 = arith.constant 0 : index
    %4 = tpu.strided_load %arg2[%c0_4, %c0_5, %c1, %c0_6] {strides = array<i32: 1, 2, 2, 1>} : memref<1x16x16x4xf32, #tpu.memory_space<vmem>>, vector<1x8x8x4xf32>
    %c0_7 = arith.constant 0 : index
    %c1_8 = arith.constant 1 : index
    %c0_9 = arith.constant 0 : index
    %c0_10 = arith.constant 0 : index
    %5 = tpu.strided_load %arg2[%c0_7, %c1_8, %c0_9, %c0_10] {strides = array<i32: 1, 2, 2, 1>} : memref<1x16x16x4xf32, #tpu.memory_space<vmem>>, vector<1x8x8x4xf32>
    %c0_11 = arith.constant 0 : index
    %c1_12 = arith.constant 1 : index
    %c1_13 = arith.constant 1 : index
    %c0_14 = arith.constant 0 : index
    %6 = tpu.strided_load %arg2[%c0_11, %c1_12, %c1_13, %c0_14] {strides = array<i32: 1, 2, 2, 1>} : memref<1x16x16x4xf32, #tpu.memory_space<vmem>>, vector<1x8x8x4xf32>
    %7 = arith.maximumf %3, %4 : vector<1x8x8x4xf32>
    %8 = arith.maximumf %5, %6 : vector<1x8x8x4xf32>
    %9 = arith.maximumf %7, %8 : vector<1x8x8x4xf32>
    %10 = vector.shape_cast %9 : vector<1x8x8x4xf32> to vector<8x8x4xf32>
    %c1_15 = arith.constant 1 : index
    %c1_16 = arith.constant 1 : index
    %c0_17 = arith.constant 0 : index
    %11 = vector.load %arg7[%c1_15, %c1_16, %c0_17] : memref<10x10x4xf32, #tpu.memory_space<vmem>>, vector<8x8x4xf32>
    tpu.vector_store %arg7[%c1_15, %c1_16, %c0_17], %10 {strides = array<i32>} : memref<10x10x4xf32, #tpu.memory_space<vmem>>, vector<8x8x4xf32>,
    %cst = arith.constant 0.000000e+00 : f32
    %12 = vector.broadcast %cst : f32 to vector<64x8xf32>
    %c0_18 = arith.constant 0 : index
    %c0_19 = arith.constant 0 : index
    %c0_20 = arith.constant 0 : index
    %13 = vector.load %arg7[%c0_18, %c0_19, %c0_20] : memref<10x10x4xf32, #tpu.memory_space<vmem>>, vector<8x8x4xf32>
    %14 = vector.shape_cast %13 : vector<8x8x4xf32> to vector<64x4xf32>
    %c0_21 = arith.constant 0 : index
    %c0_22 = arith.constant 0 : index
    %c0_23 = arith.constant 0 : index
    %c0_24 = arith.constant 0 : index
    %15 = vector.load %arg3[%c0_21, %c0_22, %c0_23, %c0_24] : memref<3x3x4x8xf32, #tpu.memory_space<vmem>>, vector<1x1x4x8xf32>
    %16 = vector.shape_cast %15 : vector<1x1x4x8xf32> to vector<4x8xf32>
    %cst_25 = arith.constant dense<0.000000e+00> : vector<64x8xf32>
    %17 = tpu.matmul %14, %16, %cst_25 {dimension_numbers = #tpu.dot_dimension_numbers<[1], [0], [0], [1], [0, 0, 1, 1], [], []>} : vector<64x4xf32>, vector<4x8xf32>, vector<64x8xf32> -> vector<64x8xf32>
    %18 = arith.addf %12, %17 : vector<64x8xf32>
    %c0_26 = arith.constant 0 : index
    %c1_27 = arith.constant 1 : index
    %c0_28 = arith.constant 0 : index
    %19 = vector.load %arg7[%c0_26, %c1_27, %c0_28] : memref<10x10x4xf32, #tpu.memory_space<vmem>>, vector<8x8x4xf32>
    %20 = vector.shape_cast %19 : vector<8x8x4xf32> to vector<64x4xf32>
    %c0_29 = arith.constant 0 : index
    %c1_30 = arith.constant 1 : index
    %c0_31 = arith.constant 0 : index
    %c0_32 = arith.constant 0 : index
    %21 = vector.load %arg3[%c0_29, %c1_30, %c0_31, %c0_32] : memref<3x3x4x8xf32, #tpu.memory_space<vmem>>, vector<1x1x4x8xf32>
    %22 = vector.shape_cast %21 : vector<1x1x4x8xf32> to vector<4x8xf32>
    %cst_33 = arith.constant dense<0.000000e+00> : vector<64x8xf32>
    %23 = tpu.matmul %20, %22, %cst_33 {dimension_numbers = #tpu.dot_dimension_numbers<[1], [0], [0], [1], [0, 0, 1, 1], [], []>} : vector<64x4xf32>, vector<4x8xf32>, vector<64x8xf32> -> vector<64x8xf32>
    %24 = arith.addf %18, %23 : vector<64x8xf32>
    %c0_34 = arith.constant 0 : index
    %c2 = arith.constant 2 : index
    %c0_35 = arith.constant 0 : index
    %25 = vector.load %arg7[%c0_34, %c2, %c0_35] : memref<10x10x4xf32, #tpu.memory_space<vmem>>, vector<8x8x4xf32>
    %26 = vector.shape_cast %25 : vector<8x8x4xf32> to vector<64x4xf32>
    %c0_36 = arith.constant 0 : index
    %c2_37 = arith.constant 2 : index
    %c0_38 = arith.constant 0 : index
    %c0_39 = arith.constant 0 : index
    %27 = vector.load %arg3[%c0_36, %c2_37, %c0_38, %c0_39] : memref<3x3x4x8xf32, #tpu.memory_space<vmem>>, vector<1x1x4x8xf32>
    %28 = vector.shape_cast %27 : vector<1x1x4x8xf32> to vector<4x8xf32>
    %cst_40 = arith.constant dense<0.000000e+00> : vector<64x8xf32>
    %29 = tpu.matmul %26, %28, %cst_40 {dimension_numbers = #tpu.dot_dimension_numbers<[1], [0], [0], [1], [0, 0, 1, 1], [], []>} : vector<64x4xf32>, vector<4x8xf32>, vector<64x8xf32> -> vector<64x8xf32>
    %30 = arith.addf %24, %29 : vector<64x8xf32>
    %c1_41 = arith.constant 1 : index
    %c0_42 = arith.constant 0 : index
    %c0_43 = arith.constant 0 : index
    %31 = vector.load %arg7[%c1_41, %c0_42, %c0_43] : memref<10x10x4xf32, #tpu.memory_space<vmem>>, vector<8x8x4xf32>
    %32 = vector.shape_cast %31 : vector<8x8x4xf32> to vector<64x4xf32>
    %c1_44 = arith.constant 1 : index
    %c0_45 = arith.constant 0 : index
    %c0_46 = arith.constant 0 : index
    %c0_47 = arith.constant 0 : index
    %33 = vector.load %arg3[%c1_44, %c0_45, %c0_46, %c0_47] : memref<3x3x4x8xf32, #tpu.memory_space<vmem>>, vector<1x1x4x8xf32>
    %34 = vector.shape_cast %33 : vector<1x1x4x8xf32> to vector<4x8xf32>
    %cst_48 = arith.constant dense<0.000000e+00> : vector<64x8xf32>
    %35 = tpu.matmul %32, %34, %cst_48 {dimension_numbers = #tpu.dot_dimension_numbers<[1], [0], [0], [1], [0, 0, 1, 1], [], []>} : vector<64x4xf32>, vector<4x8xf32>, vector<64x8xf32> -> vector<64x8xf32>
    %36 = arith.addf %30, %35 : vector<64x8xf32>
    %c1_49 = arith.constant 1 : index
    %c1_50 = arith.constant 1 : index
    %c0_51 = arith.constant 0 : index
    %37 = vector.load %arg7[%c1_49, %c1_50, %c0_51] : memref<10x10x4xf32, #tpu.memory_space<vmem>>, vector<8x8x4xf32>
    %38 = vector.shape_cast %37 : vector<8x8x4xf32> to vector<64x4xf32>
    %c1_52 = arith.constant 1 : index
    %c1_53 = arith.constant 1 : index
    %c0_54 = arith.constant 0 : index
    %c0_55 = arith.constant 0 : index
    %39 = vector.load %arg3[%c1_52, %c1_53, %c0_54, %c0_55] : memref<3x3x4x8xf32, #tpu.memory_space<vmem>>, vector<1x1x4x8xf32>
    %40 = vector.shape_cast %39 : vector<1x1x4x8xf32> to vector<4x8xf32>
    %cst_56 = arith.constant dense<0.000000e+00> : vector<64x8xf32>
    %41 = tpu.matmul %38, %40, %cst_56 {dimension_numbers = #tpu.dot_dimension_numbers<[1], [0], [0], [1], [0, 0, 1, 1], [], []>} : vector<64x4xf32>, vector<4x8xf32>, vector<64x8xf32> -> vector<64x8xf32>
    %42 = arith.addf %36, %41 : vector<64x8xf32>
    %c1_57 = arith.constant 1 : index
    %c2_58 = arith.constant 2 : index
    %c0_59 = arith.constant 0 : index
    %43 = vector.load %arg7[%c1_57, %c2_58, %c0_59] : memref<10x10x4xf32, #tpu.memory_space<vmem>>, vector<8x8x4xf32>
    %44 = vector.shape_cast %43 : vector<8x8x4xf32> to vector<64x4xf32>
    %c1_60 = arith.constant 1 : index
    %c2_61 = arith.constant 2 : index
    %c0_62 = arith.constant 0 : index
    %c0_63 = arith.constant 0 : index
    %45 = vector.load %arg3[%c1_60, %c2_61, %c0_62, %c0_63] : memref<3x3x4x8xf32, #tpu.memory_space<vmem>>, vector<1x1x4x8xf32>
    %46 = vector.shape_cast %45 : vector<1x1x4x8xf32> to vector<4x8xf32>
    %cst_64 = arith.constant dense<0.000000e+00> : vector<64x8xf32>
    %47 = tpu.matmul %44, %46, %cst_64 {dimension_numbers = #tpu.dot_dimension_numbers<[1], [0], [0], [1], [0, 0, 1, 1], [], []>} : vector<64x4xf32>, vector<4x8xf32>, vector<64x8xf32> -> vector<64x8xf32>
    %48 = arith.addf %42, %47 : vector<64x8xf32>
    %c2_65 = arith.constant 2 : index
    %c0_66 = arith.constant 0 : index
    %c0_67 = arith.constant 0 : index
    %49 = vector.load %arg7[%c2_65, %c0_66, %c0_67] : memref<10x10x4xf32, #tpu.memory_space<vmem>>, vector<8x8x4xf32>
    %50 = vector.shape_cast %49 : vector<8x8x4xf32> to vector<64x4xf32>
    %c2_68 = arith.constant 2 : index
    %c0_69 = arith.constant 0 : index
    %c0_70 = arith.constant 0 : index
    %c0_71 = arith.constant 0 : index
    %51 = vector.load %arg3[%c2_68, %c0_69, %c0_70, %c0_71] : memref<3x3x4x8xf32, #tpu.memory_space<vmem>>, vector<1x1x4x8xf32>
    %52 = vector.shape_cast %51 : vector<1x1x4x8xf32> to vector<4x8xf32>
    %cst_72 = arith.constant dense<0.000000e+00> : vector<64x8xf32>
    %53 = tpu.matmul %50, %52, %cst_72 {dimension_numbers = #tpu.dot_dimension_numbers<[1], [0], [0], [1], [0, 0, 1, 1], [], []>} : vector<64x4xf32>, vector<4x8xf32>, vector<64x8xf32> -> vector<64x8xf32>
    %54 = arith.addf %48, %53 : vector<64x8xf32>
    %c2_73 = arith.constant 2 : index
    %c1_74 = arith.constant 1 : index
    %c0_75 = arith.constant 0 : index
    %55 = vector.load %arg7[%c2_73, %c1_74, %c0_75] : memref<10x10x4xf32, #tpu.memory_space<vmem>>, vector<8x8x4xf32>
    %56 = vector.shape_cast %55 : vector<8x8x4xf32> to vector<64x4xf32>
    %c2_76 = arith.constant 2 : index
    %c1_77 = arith.constant 1 : index
    %c0_78 = arith.constant 0 : index
    %c0_79 = arith.constant 0 : index
    %57 = vector.load %arg3[%c2_76, %c1_77, %c0_78, %c0_79] : memref<3x3x4x8xf32, #tpu.memory_space<vmem>>, vector<1x1x4x8xf32>
    %58 = vector.shape_cast %57 : vector<1x1x4x8xf32> to vector<4x8xf32>
    %cst_80 = arith.constant dense<0.000000e+00> : vector<64x8xf32>
    %59 = tpu.matmul %56, %58, %cst_80 {dimension_numbers = #tpu.dot_dimension_numbers<[1], [0], [0], [1], [0, 0, 1, 1], [], []>} : vector<64x4xf32>, vector<4x8xf32>, vector<64x8xf32> -> vector<64x8xf32>
    %60 = arith.addf %54, %59 : vector<64x8xf32>
    %c2_81 = arith.constant 2 : index
    %c2_82 = arith.constant 2 : index
    %c0_83 = arith.constant 0 : index
    %61 = vector.load %arg7[%c2_81, %c2_82, %c0_83] : memref<10x10x4xf32, #tpu.memory_space<vmem>>, vector<8x8x4xf32>
    %62 = vector.shape_cast %61 : vector<8x8x4xf32> to vector<64x4xf32>
    %c2_84 = arith.constant 2 : index
    %c2_85 = arith.constant 2 : index
    %c0_86 = arith.constant 0 : index
    %c0_87 = arith.constant 0 : index
    %63 = vector.load %arg3[%c2_84, %c2_85, %c0_86, %c0_87] : memref<3x3x4x8xf32, #tpu.memory_space<vmem>>, vector<1x1x4x8xf32>
    %64 = vector.shape_cast %63 : vector<1x1x4x8xf32> to vector<4x8xf32>
    %cst_88 = arith.constant dense<0.000000e+00> : vector<64x8xf32>
    %65 = tpu.matmul %62, %64, %cst_88 {dimension_numbers = #tpu.dot_dimension_numbers<[1], [0], [0], [1], [0, 0, 1, 1], [], []>} : vector<64x4xf32>, vector<4x8xf32>, vector<64x8xf32> -> vector<64x8xf32>
    %66 = arith.addf %60, %65 : vector<64x8xf32>
    %c0_89 = arith.constant 0 : index
    %c0_90 = arith.constant 0 : index
    %c0_91 = arith.constant 0 : index
    %67 = vector.load %arg4[%c0_89, %c0_90, %c0_91] : memref<1x64x8xf32, #tpu.memory_space<vmem>>, vector<1x64x8xf32>
    %68 = vector.shape_cast %67 : vector<1x64x8xf32> to vector<64x8xf32>
    %69 = vector.shape_cast %66 : vector<64x8xf32> to vector<1x64x8xf32>
    tpu.vector_store %arg4[%c0_89, %c0_90, %c0_91], %69 {strides = array<i32>} : memref<1x64x8xf32, #tpu.memory_space<vmem>>, vector<1x64x8xf32>,
    %c0_i32_92 = arith.constant 0 : i32
    %70 = arith.cmpi eq, %arg1, %c0_i32_92 : i32
    %71 = arith.extui %70 : i1 to i32
    %c0_i32_93 = arith.constant 0 : i32
    %72 = arith.cmpi ne, %71, %c0_i32_93 : i32
    scf.if %72 {
      %cst_108 = arith.constant 0.000000e+00 : f32
      %90 = vector.broadcast %cst_108 : f32 to vector<1x1x8xf32>
      %c0_109 = arith.constant 0 : index
      %c0_110 = arith.constant 0 : index
      %c0_111 = arith.constant 0 : index
      %91 = vector.load %arg5[%c0_109, %c0_110, %c0_111] : memref<1x1x8xf32, #tpu.memory_space<vmem>>, vector<1x1x8xf32>
      tpu.vector_store %arg5[%c0_109, %c0_110, %c0_111], %90 {strides = array<i32>} : memref<1x1x8xf32, #tpu.memory_space<vmem>>, vector<1x1x8xf32>,
      %cst_112 = arith.constant 0.000000e+00 : f32
      %92 = vector.broadcast %cst_112 : f32 to vector<1x1x8xf32>
      %c0_113 = arith.constant 0 : index
      %c0_114 = arith.constant 0 : index
      %c0_115 = arith.constant 0 : index
      %93 = vector.load %arg6[%c0_113, %c0_114, %c0_115] : memref<1x1x8xf32, #tpu.memory_space<vmem>>, vector<1x1x8xf32>
      tpu.vector_store %arg6[%c0_113, %c0_114, %c0_115], %92 {strides = array<i32>} : memref<1x1x8xf32, #tpu.memory_space<vmem>>, vector<1x1x8xf32>,
    } else {
    }
    %c0_94 = arith.constant 0 : index
    %c0_95 = arith.constant 0 : index
    %c0_96 = arith.constant 0 : index
    %73 = vector.load %arg5[%c0_94, %c0_95, %c0_96] : memref<1x1x8xf32, #tpu.memory_space<vmem>>, vector<1x1x8xf32>
    %74 = vector.shape_cast %73 : vector<1x1x8xf32> to vector<1x8xf32>
    %cst_97 = arith.constant dense<0.000000e+00> : vector<8xf32>
    %75 = vector.multi_reduction <add>, %66, %cst_97 [0] : vector<64x8xf32> to vector<8xf32>
    %76 = vector.shape_cast %75 : vector<8xf32> to vector<1x8xf32>
    %77 = arith.addf %74, %76 : vector<1x8xf32>
    %c0_98 = arith.constant 0 : index
    %c0_99 = arith.constant 0 : index
    %c0_100 = arith.constant 0 : index
    %78 = vector.load %arg5[%c0_98, %c0_99, %c0_100] : memref<1x1x8xf32, #tpu.memory_space<vmem>>, vector<1x1x8xf32>
    %79 = vector.shape_cast %78 : vector<1x1x8xf32> to vector<1x8xf32>
    %80 = vector.shape_cast %77 : vector<1x8xf32> to vector<1x1x8xf32>
    tpu.vector_store %arg5[%c0_98, %c0_99, %c0_100], %80 {strides = array<i32>} : memref<1x1x8xf32, #tpu.memory_space<vmem>>, vector<1x1x8xf32>,
    %c0_101 = arith.constant 0 : index
    %c0_102 = arith.constant 0 : index
    %c0_103 = arith.constant 0 : index
    %81 = vector.load %arg6[%c0_101, %c0_102, %c0_103] : memref<1x1x8xf32, #tpu.memory_space<vmem>>, vector<1x1x8xf32>
    %82 = vector.shape_cast %81 : vector<1x1x8xf32> to vector<1x8xf32>
    %83 = arith.mulf %66, %66 : vector<64x8xf32>
    %cst_104 = arith.constant dense<0.000000e+00> : vector<8xf32>
    %84 = vector.multi_reduction <add>, %83, %cst_104 [0] : vector<64x8xf32> to vector<8xf32>
    %85 = vector.shape_cast %84 : vector<8xf32> to vector<1x8xf32>
    %86 = arith.addf %82, %85 : vector<1x8xf32>
    %c0_105 = arith.constant 0 : index
    %c0_106 = arith.constant 0 : index
    %c0_107 = arith.constant 0 : index
    %87 = vector.load %arg6[%c0_105, %c0_106, %c0_107] : memref<1x1x8xf32, #tpu.memory_space<vmem>>, vector<1x1x8xf32>
    %88 = vector.shape_cast %87 : vector<1x1x8xf32> to vector<1x8xf32>
    %89 = vector.shape_cast %86 : vector<1x8xf32> to vector<1x1x8xf32>
    tpu.vector_store %arg6[%c0_105, %c0_106, %c0_107], %89 {strides = array<i32>} : memref<1x1x8xf32, #tpu.memory_space<vmem>>, vector<1x1x8xf32>,
    return
  }
  func.func @transform_0(%arg0: i32, %arg1: i32) -> (i32, i32, i32, i32) {
    %c1_i32 = arith.constant 1 : i32
    %0 = arith.muli %arg0, %c1_i32 : i32
    %1 = arith.addi %0, %arg1 : i32
    %c0_i32 = arith.constant 0 : i32
    %c0_i32_0 = arith.constant 0 : i32
    %c0_i32_1 = arith.constant 0 : i32
    %c0_i32_2 = arith.constant 0 : i32
    return %1, %c0_i32, %c0_i32_0, %c0_i32_1 : i32, i32, i32, i32
  }
  func.func @transform_1(%arg0: i32, %arg1: i32) -> (i32, i32, i32, i32) {
    %c0_i32 = arith.constant 0 : i32
    %c0_i32_0 = arith.constant 0 : i32
    %c0_i32_1 = arith.constant 0 : i32
    %c0_i32_2 = arith.constant 0 : i32
    %c0_i32_3 = arith.constant 0 : i32
    return %c0_i32, %c0_i32_0, %c0_i32_1, %c0_i32_2 : i32, i32, i32, i32
  }
  func.func @transform_2(%arg0: i32, %arg1: i32) -> (i32, i32, i32) {
    %c1_i32 = arith.constant 1 : i32
    %0 = arith.muli %arg0, %c1_i32 : i32
    %1 = arith.addi %0, %arg1 : i32
    %c0_i32 = arith.constant 0 : i32
    %c0_i32_0 = arith.constant 0 : i32
    %c0_i32_1 = arith.constant 0 : i32
    return %1, %c0_i32, %c0_i32_0 : i32, i32, i32
  }
  func.func @transform_3(%arg0: i32, %arg1: i32) -> (i32, i32, i32) {
    %c0_i32 = arith.constant 0 : i32
    %c0_i32_0 = arith.constant 0 : i32
    %c0_i32_1 = arith.constant 0 : i32
    return %arg0, %c0_i32, %c0_i32_0 : i32, i32, i32
  }
  func.func @transform_4(%arg0: i32, %arg1: i32) -> (i32, i32, i32) {
    %c0_i32 = arith.constant 0 : i32
    %c0_i32_0 = arith.constant 0 : i32
    %c0_i32_1 = arith.constant 0 : i32
    return %arg0, %c0_i32, %c0_i32_0 : i32, i32, i32
  }
}

</mosaic_0001>

<llo_original>
// kernel: tpu_custom_call.1
$region0: #{tpu_custom_call.1}
  #allocation0 [shape = 'u32[]', space=smem, size = 0x4, offset = 0x4, fixed_abs, tag = 'smem constant byte address 0x4 - core index']
  #allocation1 [shape = 'u32[144,128]{1,0:T(1,128)}', space=vmem, size = 0x12000, scoped, tag = 'internal scratch']
  #allocation2 [shape = 'f32[10,10,4]{2,1,0:T(8,128)}', space=vmem, size = 0x14000, scoped, tag = 'scratch operand']
  %s0 = inlined_call_operand.hbm [shape: f32[2,16,16,4], index: 0, kind: input, shape index: {}]
  %s1 = inlined_call_operand.hbm [shape: f32[3,3,4,8], index: 1, kind: input, shape index: {}]
  %s2 = inlined_call_operand.hbm [shape: f32[2,64,8], index: 2, kind: output, shape index: {0}]
  %s3 = inlined_call_operand.hbm [shape: f32[2,1,8], index: 3, kind: output, shape index: {1}]
  %s4 = inlined_call_operand.hbm [shape: f32[2,1,8], index: 4, kind: output, shape index: {2}]
  %5 = xla_tuple %s2, %s3, %s4
  %s6 = sld [smem:[#allocation0]]
  $region73: #{tpu_custom_call.1} parent=0
    _
  %s8 = ssub.s32 1, %s6
  %s9 = scalar_select 0, %s8, %s6
  $region1: #{tpu_custom_call.1} parent=0
    #allocation3 [shape = 'u8[262144]{0}', space=vmem, size = 0x40000, scoped, tag = 'input window, operand 0']
    #allocation4 [shape = 's32[2]{0}', space=sflag, size = 0x8, scoped, tag = 'scoped memory for tpu_custom_call.1']
    #allocation5 [shape = 's32[2]{0}', space=sflag, size = 0x8, scoped, tag = 'scoped memory for tpu_custom_call.1']
    #allocation6 [shape = 'u8[18432]{0}', space=vmem, size = 0x4800, scoped, tag = 'input window, operand 1, single buffered']
    #allocation7 [shape = 's32[1]{0}', space=sflag, size = 0x4, scoped, tag = 'scoped memory for tpu_custom_call.1']
    #allocation8 [shape = 'u8[65536]{0}', space=vmem, size = 0x10000, scoped, tag = 'output window, operand 0']
    #allocation9 [shape = 'u8[1024]{0}', space=vmem, size = 0x400, scoped, tag = 'output window, operand 1']
    #allocation10 [shape = 's32[2]{0}', space=sflag, size = 0x8, scoped, tag = 'scoped memory for tpu_custom_call.1']
    #allocation11 [shape = 'u8[1024]{0}', space=vmem, size = 0x400, scoped, tag = 'output window, operand 2']
    %10 = vsyncpa [#allocation4], 0
    %s11 = scalar_lea.sflag [#allocation4], 1
    %12 = vsyncpa %s11, 0
    %13 = vsyncpa [#allocation7], 0
    %14 = vsyncpa [#allocation5], 0
    %s15 = scalar_lea.sflag [#allocation5], 1
    %16 = vsyncpa %s15, 0
    %17 = vsyncpa [#allocation10], 0
    %s18 = scalar_lea.sflag [#allocation10], 1
    %19 = vsyncpa %s18, 0
    loop: start=0, step=1, limit=4
    $region2: #{tpu_custom_call.1} parent=1 // loop_pre_header
      _
    $region3: #{tpu_custom_call.1} parent=1 // loop_header
      %s21 = sphi 0, %s25
      %p22 = scmp.ge.s32.totalorder %s21, 4
      %s28 = sphi 0, %s40
      %s29 = sphi 0, %s36
      %s30 = sphi 0, %s28
      %s31 = sphi 0, %s29
      %s32 = sphi 0, %s30
      %s33 = sphi 0, %s31
      %s45 = sphi 0, %s47
      %s48 = sphi 0, %s45
      %s49 = sphi 0, %s48
      %s65 = sphi 0, %s49
      %s69 = sphi 0, %s69
      %s71 = sphi 0, %s69
      %s72 = sphi 0, %s71
      %s86 = sphi 0, %s72
      %s94 = sphi 0, %s96
      %s97 = sphi 0, %s94
      %s98 = sphi 0, %s97
      %s114 = sphi 0, %s98
      %s120 = sphi 0, %s122
      %s123 = sphi 0, %s120
      %s124 = sphi 0, %s123
      %s140 = sphi 0, %s124
      %s146 = sphi 0, %s148
      %s149 = sphi 0, %s146
      %s150 = sphi 0, %s149
      %s166 = sphi 0, %s150
    $region4: #{tpu_custom_call.1} parent=1 // loop_header_branch
      %24 = sbr.rel (%p22) target = $region8
    $region5: #{tpu_custom_call.1} parent=1 // loop_body
      %s26 = ssub.s32 %s21, 1
      %s27 = ssub.s32 %s21, 2
      %s34 = sadd.s32 1, %s29
      %p35 = scmp.ge.s32.totalorder %s34, 1
      %s36 = scalar_select %p35, 0, %s34
      %s37 = sadd.s32 1, %s28
      %s38 = scalar_select %p35, %s37, %s28
      %p39 = scmp.ge.s32.totalorder %s38, 2
      %s40 = scalar_select %p39, 0, %s38
      %s41 = sadd.s32 %s28, %s29
      %s42 = sadd.s32 %s40, %s36
      %s43 = ssub.s32 %s41, %s42
      %p44 = scmp.eq.s32.totalorder %s43, 0
      %s46 = sadd.s32 %s45, 1
      %s47 = scalar_select %p44, %s45, %s46
      %p50 = pneg %p44
      %p51 = scmp.eq.s32.totalorder %s21, 1
      %p52 = por %p50, %p51
      %p53 = scmp.ne.s32.totalorder %s45, %s48
      %p54 = scmp.eq.s32.totalorder %s21, 0
      %p55 = por %p53, %p54
      %p56 = scmp.ne.s32.totalorder %s45, %s48
      %p57 = scmp.eq.s32.totalorder %s26, 1
      %p58 = por %p56, %p57
      %p59 = scmp.ne.s32.totalorder %s48, %s49
      %p60 = scmp.eq.s32.totalorder %s26, 0
      %p61 = por %p59, %p60
      %p62 = scmp.ne.s32.totalorder %s48, %s49
      %p63 = scmp.eq.s32.totalorder %s27, 1
      %p64 = por %p62, %p63
      %p66 = scmp.ne.s32.totalorder %s49, %s65
      %p67 = scmp.eq.s32.totalorder %s27, 0
      %p68 = por %p66, %p67
      %s70 = sadd.s32 %s69, 1
      %p73 = scmp.eq.s32.totalorder %s21, 1
      %p74 = scmp.ne.s32.totalorder %s69, %s71
      %p75 = scmp.eq.s32.totalorder %s21, 0
      %p76 = por %p74, %p75
      %p77 = scmp.ne.s32.totalorder %s69, %s71
      %p78 = scmp.eq.s32.totalorder %s26, 1
      %p79 = por %p77, %p78
      %p80 = scmp.ne.s32.totalorder %s71, %s72
      %p81 = scmp.eq.s32.totalorder %s26, 0
      %p82 = por %p80, %p81
      %p83 = scmp.ne.s32.totalorder %s71, %s72
      %p84 = scmp.eq.s32.totalorder %s27, 1
      %p85 = por %p83, %p84
      %p87 = scmp.ne.s32.totalorder %s72, %s86
      %p88 = scmp.eq.s32.totalorder %s27, 0
      %p89 = por %p87, %p88
      %s90 = sadd.s32 %s28, %s29
      %s91 = sadd.s32 %s40, %s36
      %s92 = ssub.s32 %s90, %s91
      %p93 = scmp.eq.s32.totalorder %s92, 0
      %s95 = sadd.s32 %s94, 1
      %s96 = scalar_select %p93, %s94, %s95
      %p99 = pneg %p93
      %p100 = scmp.eq.s32.totalorder %s21, 1
      %p101 = por %p99, %p100
      %p102 = scmp.ne.s32.totalorder %s94, %s97
      %p103 = scmp.eq.s32.totalorder %s21, 0
      %p104 = por %p102, %p103
      %p105 = scmp.ne.s32.totalorder %s94, %s97
      %p106 = scmp.eq.s32.totalorder %s26, 1
      %p107 = por %p105, %p106
      %p108 = scmp.ne.s32.totalorder %s97, %s98
      %p109 = scmp.eq.s32.totalorder %s26, 0
      %p110 = por %p108, %p109
      %p111 = scmp.ne.s32.totalorder %s97, %s98
      %p112 = scmp.eq.s32.totalorder %s27, 1
      %p113 = por %p111, %p112
      %p115 = scmp.ne.s32.totalorder %s98, %s114
      %p116 = scmp.eq.s32.totalorder %s27, 0
      %p117 = por %p115, %p116
      %s118 = ssub.s32 %s28, %s40
      %p119 = scmp.eq.s32.totalorder %s118, 0
      %s121 = sadd.s32 %s120, 1
      %s122 = scalar_select %p119, %s120, %s121
      %p125 = pneg %p119
      %p126 = scmp.eq.s32.totalorder %s21, 1
      %p127 = por %p125, %p126
      %p128 = scmp.ne.s32.totalorder %s120, %s123
      %p129 = scmp.eq.s32.totalorder %s21, 0
      %p130 = por %p128, %p129
      %p131 = scmp.ne.s32.totalorder %s120, %s123
      %p132 = scmp.eq.s32.totalorder %s26, 1
      %p133 = por %p131, %p132
      %p134 = scmp.ne.s32.totalorder %s123, %s124
      %p135 = scmp.eq.s32.totalorder %s26, 0
      %p136 = por %p134, %p135
      %p137 = scmp.ne.s32.totalorder %s123, %s124
      %p138 = scmp.eq.s32.totalorder %s27, 1
      %p139 = por %p137, %p138
      %p141 = scmp.ne.s32.totalorder %s124, %s140
      %p142 = scmp.eq.s32.totalorder %s27, 0
      %p143 = por %p141, %p142
      %s144 = ssub.s32 %s28, %s40
      %p145 = scmp.eq.s32.totalorder %s144, 0
      %s147 = sadd.s32 %s146, 1
      %s148 = scalar_select %p145, %s146, %s147
      %p151 = pneg %p145
      %p152 = scmp.eq.s32.totalorder %s21, 1
      %p153 = por %p151, %p152
      %p154 = scmp.ne.s32.totalorder %s146, %s149
      %p155 = scmp.eq.s32.totalorder %s21, 0
      %p156 = por %p154, %p155
      %p157 = scmp.ne.s32.totalorder %s146, %s149
      %p158 = scmp.eq.s32.totalorder %s26, 1
      %p159 = por %p157, %p158
      %p160 = scmp.ne.s32.totalorder %s149, %s150
      %p161 = scmp.eq.s32.totalorder %s26, 0
      %p162 = por %p160, %p161
      %p163 = scmp.ne.s32.totalorder %s149, %s150
      %p164 = scmp.eq.s32.totalorder %s27, 1
      %p165 = por %p163, %p164
      %p167 = scmp.ne.s32.totalorder %s150, %s166
      %p168 = scmp.eq.s32.totalorder %s27, 0
      %p169 = por %p167, %p168
      %p170 = scmp.le.s32.totalorder 1, %s21
      %p171 = scmp.lt.s32.totalorder %s21, 3
      %p172 = pnand %p170, %p171
      %p173 = pneg %p172
      // Predicated region
      $region9: #{tpu_custom_call.1} parent=5 // pred_check
        _
      $region10: #{tpu_custom_call.1} parent=5 // pred_check_branch
        %175 = sbr.rel (%p172) target = $region12
      $region11: #{tpu_custom_call.1} parent=5 // pred_region
        %s176 = ssub.s32 %s21, 1
        // Predicated region
        $region13: #{tpu_custom_call.1} parent=11 // pred_check
          %p177 = pneg %p82
        $region14: #{tpu_custom_call.1} parent=11 // pred_check_branch
          %179 = sbr.rel (%p177) target = $region16
        $region15: #{tpu_custom_call.1} parent=11 // pred_region
          %s181 = ssub.s32 576, 576
          %182 = vsyncadd [#allocation7], %s181
          %s183 = sshll.u32 [#allocation6], 4
          %s184 = int_to_ptr.vmem [resolvable:$true] %s183
          %189 = dma.hbm_to_vmem [thread:$0]  %s1, 576, %s184, [#allocation7], 64, 64, 4
        $region16: #{tpu_custom_call.1} parent=11 // pred_fallthru
          _
      $region12: #{tpu_custom_call.1} parent=5 // pred_fallthru
        _
      %p190 = scmp.lt.s32.totalorder %s21, 2
      // Predicated region
      $region17: #{tpu_custom_call.1} parent=5 // pred_check
        %p191 = pneg %p190
      $region18: #{tpu_custom_call.1} parent=5 // pred_check_branch
        %193 = sbr.rel (%p191) target = $region20
      $region19: #{tpu_custom_call.1} parent=5 // pred_region
        // Predicated region
        $region21: #{tpu_custom_call.1} parent=19 // pred_check
          %p194 = pneg %p55
        $region22: #{tpu_custom_call.1} parent=19 // pred_check_branch
          %196 = sbr.rel (%p194) target = $region24
        $region23: #{tpu_custom_call.1} parent=19 // pred_region
          %s197 = sand.u32 %s45, 1
          %s198 = scalar_lea.sflag [#allocation4], %s197
          %s199 = sand.u32 %s45, 1
          %s200 = smul.addr %s199, 256
          %s201 = scalar_lea.vmem [#allocation3], %s200
          %s202 = sadd.s32 %s28, %s29
          %s204 = ssub.s32 4096, 4096
          %205 = vsyncadd %s198, %s204
          %s206 = smul.addr %s202, 32
          %s207 = smul.addr %s206, 128
          %s208 = scalar_lea.hbm %s0, %s207
          %s209 = sshll.u32 %s201, 4
          %s210 = int_to_ptr.vmem [resolvable:$true] %s209
          %215 = dma.hbm_to_vmem [thread:$0]  %s208, 4096, %s210, %s198, 128, 128, 8
        $region24: #{tpu_custom_call.1} parent=19 // pred_fallthru
          _
      $region20: #{tpu_custom_call.1} parent=5 // pred_fallthru
        _
      %p216 = scmp.le.s32.totalorder 1, %s21
      %p217 = scmp.lt.s32.totalorder %s21, 3
      %p218 = pnand %p216, %p217
      %p219 = pneg %p218
      // Predicated region
      $region25: #{tpu_custom_call.1} parent=5 // pred_check
        _
      $region26: #{tpu_custom_call.1} parent=5 // pred_check_branch
        %221 = sbr.rel (%p218) target = $region28
      $region27: #{tpu_custom_call.1} parent=5 // pred_region
        %s222 = ssub.s32 %s21, 1
        %s223 = sand.u32 %s48, 1
        %s224 = scalar_lea.sflag [#allocation4], %s223
        %s225 = sand.u32 %s48, 1
        %s226 = smul.addr %s225, 256
        %s227 = scalar_lea.vmem [#allocation3], %s226
        // Predicated region
        $region29: #{tpu_custom_call.1} parent=27 // pred_check
          %p228 = pneg %p61
        $region30: #{tpu_custom_call.1} parent=27 // pred_check_branch
          %230 = sbr.rel (%p228) target = $region32
        $region31: #{tpu_custom_call.1} parent=27 // pred_region
          %231 = dma.done %s224, 4096
        $region32: #{tpu_custom_call.1} parent=27 // pred_fallthru
          _
        // Predicated region
        $region33: #{tpu_custom_call.1} parent=27 // pred_check
          %p232 = pneg %p82
        $region34: #{tpu_custom_call.1} parent=27 // pred_check_branch
          %234 = sbr.rel (%p232) target = $region36
        $region35: #{tpu_custom_call.1} parent=27 // pred_region
          %235 = dma.done [#allocation7], 576
        $region36: #{tpu_custom_call.1} parent=27 // pred_fallthru
          _
        %s236 = sand.u32 %s48, 1
        %s237 = scalar_lea.sflag [#allocation4], %s236
        %s238 = sand.u32 %s48, 1
        %s239 = smul.addr %s238, 256
        %s240 = scalar_lea.vmem [#allocation3], %s239
        %p241 = pneg %p61
        %p242 = pneg %p58
        %p243 = pneg %p82
        %p244 = pneg %p79
        %p245 = pneg %p110
        %p246 = pneg %p107
        %s247 = sand.u32 %s97, 1
        %s248 = scalar_lea.sflag [#allocation5], %s247
        %s249 = sand.u32 %s97, 1
        %s250 = smul.addr %s249, 64
        %s251 = scalar_lea.vmem [#allocation8], %s250
        %p252 = pneg %p136
        %p253 = pneg %p133
        %s254 = sand.u32 %s26, 1
        %s255 = scalar_lea.sflag [#allocation10], %s254
        %s256 = sand.u32 %s123, 1
        %s257 = scalar_lea.vmem [#allocation9], %s256
        %p258 = pneg %p162
        %p259 = pneg %p159
        %s260 = sand.u32 %s26, 1
        %s261 = scalar_lea.sflag [#allocation10], %s260
        %s262 = sand.u32 %s149, 1
        %s263 = scalar_lea.vmem [#allocation11], %s262
        %s264 = sadd.s32 %s30, %s31
        %s265 = sadd.s32 %s30, %s31
        %p266 = scmp.eq.s32.totalorder %s31, 0
        // Predicated region
        $region37: #{tpu_custom_call.1} parent=27 // pred_check
          %p267 = pneg %p266
        $region38: #{tpu_custom_call.1} parent=27 // pred_check_branch
          %269 = sbr.rel (%p267) target = $region40
        $region39: #{tpu_custom_call.1} parent=27 // pred_region
          %vm270 = vcmask 31744
          %271 = vst.msk [vmem:[#allocation2] sm:$0xff] %vm270, 0.0
          %vm272 = vcmask 25600
          %273 = vst.msk [vmem:[#allocation2 + $0x8] sm:$0x3] %vm272, 0.0
          %274 = vst.msk [vmem:[#allocation2 + $0x10] sm:$0xff] %vm270, 0.0
          %275 = vst.msk [vmem:[#allocation2 + $0x18] sm:$0x3] %vm272, 0.0
          %276 = vst.msk [vmem:[#allocation2 + $0x20] sm:$0xff] %vm270, 0.0
          %277 = vst.msk [vmem:[#allocation2 + $0x28] sm:$0x3] %vm272, 0.0
          %278 = vst.msk [vmem:[#allocation2 + $0x30] sm:$0xff] %vm270, 0.0
          %279 = vst.msk [vmem:[#allocation2 + $0x38] sm:$0x3] %vm272, 0.0
          %280 = vst.msk [vmem:[#allocation2 + $0x40] sm:$0xff] %vm270, 0.0
          %281 = vst.msk [vmem:[#allocation2 + $0x48] sm:$0x3] %vm272, 0.0
          %282 = vst.msk [vmem:[#allocation2 + $0x50] sm:$0xff] %vm270, 0.0
          %283 = vst.msk [vmem:[#allocation2 + $0x58] sm:$0x3] %vm272, 0.0
          %284 = vst.msk [vmem:[#allocation2 + $0x60] sm:$0xff] %vm270, 0.0
          %285 = vst.msk [vmem:[#allocation2 + $0x68] sm:$0x3] %vm272, 0.0
          %286 = vst.msk [vmem:[#allocation2 + $0x70] sm:$0xff] %vm270, 0.0
          %287 = vst.msk [vmem:[#allocation2 + $0x78] sm:$0x3] %vm272, 0.0
          %288 = vst.msk [vmem:[#allocation2 + $0x80] sm:$0xff] %vm270, 0.0
          %289 = vst.msk [vmem:[#allocation2 + $0x88] sm:$0x3] %vm272, 0.0
          %290 = vst.msk [vmem:[#allocation2 + $0x90] sm:$0xff] %vm270, 0.0
          %291 = vst.msk [vmem:[#allocation2 + $0x98] sm:$0x3] %vm272, 0.0
        $region40: #{tpu_custom_call.1} parent=27 // pred_fallthru
          _
        %v292 = vld [vmem:[%s227] ss:$2 sm:$0xff]
        %s293 = scalar_lea.vmem %s227, 32 [#allocation3]
        %v294 = vld [vmem:[%s293] ss:$2 sm:$0xff]
        %s295 = scalar_lea.vmem %s227, 64 [#allocation3]
        %v296 = vld [vmem:[%s295] ss:$2 sm:$0xff]
        %s297 = scalar_lea.vmem %s227, 96 [#allocation3]
        %v298 = vld [vmem:[%s297] ss:$2 sm:$0xff]
        %s299 = scalar_lea.vmem %s227, 128 [#allocation3]
        %v300 = vld [vmem:[%s299] ss:$2 sm:$0xff]
        %s301 = scalar_lea.vmem %s227, 160 [#allocation3]
        %v302 = vld [vmem:[%s301] ss:$2 sm:$0xff]
        %s303 = scalar_lea.vmem %s227, 192 [#allocation3]
        %v304 = vld [vmem:[%s303] ss:$2 sm:$0xff]
        %s305 = scalar_lea.vmem %s227, 224 [#allocation3]
        %v306 = vld [vmem:[%s305] ss:$2 sm:$0xff]
        %s307 = scalar_lea.vmem %s227, 1 [#allocation3]
        %v308 = vld [vmem:[%s307] ss:$2 sm:$0xff]
        %s309 = scalar_lea.vmem %s227, 33 [#allocation3]
        %v310 = vld [vmem:[%s309] ss:$2 sm:$0xff]
        %s311 = scalar_lea.vmem %s227, 65 [#allocation3]
        %v312 = vld [vmem:[%s311] ss:$2 sm:$0xff]
        %s313 = scalar_lea.vmem %s227, 97 [#allocation3]
        %v314 = vld [vmem:[%s313] ss:$2 sm:$0xff]
        %s315 = scalar_lea.vmem %s227, 129 [#allocation3]
        %v316 = vld [vmem:[%s315] ss:$2 sm:$0xff]
        %s317 = scalar_lea.vmem %s227, 161 [#allocation3]
        %v318 = vld [vmem:[%s317] ss:$2 sm:$0xff]
        %s319 = scalar_lea.vmem %s227, 193 [#allocation3]
        %v320 = vld [vmem:[%s319] ss:$2 sm:$0xff]
        %s321 = scalar_lea.vmem %s227, 225 [#allocation3]
        %v322 = vld [vmem:[%s321] ss:$2 sm:$0xff]
        %s323 = scalar_lea.vmem %s227, 16 [#allocation3]
        %v324 = vld [vmem:[%s323] ss:$2 sm:$0xff]
        %s325 = scalar_lea.vmem %s323, 32 [#allocation3]
        %v326 = vld [vmem:[%s325] ss:$2 sm:$0xff]
        %s327 = scalar_lea.vmem %s323, 64 [#allocation3]
        %v328 = vld [vmem:[%s327] ss:$2 sm:$0xff]
        %s329 = scalar_lea.vmem %s323, 96 [#allocation3]
        %v330 = vld [vmem:[%s329] ss:$2 sm:$0xff]
        %s331 = scalar_lea.vmem %s323, 128 [#allocation3]
        %v332 = vld [vmem:[%s331] ss:$2 sm:$0xff]
        %s333 = scalar_lea.vmem %s323, 160 [#allocation3]
        %v334 = vld [vmem:[%s333] ss:$2 sm:$0xff]
        %s335 = scalar_lea.vmem %s323, 192 [#allocation3]
        %v336 = vld [vmem:[%s335] ss:$2 sm:$0xff]
        %s337 = scalar_lea.vmem %s323, 224 [#allocation3]
        %v338 = vld [vmem:[%s337] ss:$2 sm:$0xff]
        %s339 = scalar_lea.vmem %s323, 1 [#allocation3]
        %v340 = vld [vmem:[%s339] ss:$2 sm:$0xff]
        %s341 = scalar_lea.vmem %s323, 33 [#allocation3]
        %v342 = vld [vmem:[%s341] ss:$2 sm:$0xff]
        %s343 = scalar_lea.vmem %s323, 65 [#allocation3]
        %v344 = vld [vmem:[%s343] ss:$2 sm:$0xff]
        %s345 = scalar_lea.vmem %s323, 97 [#allocation3]
        %v346 = vld [vmem:[%s345] ss:$2 sm:$0xff]
        %s347 = scalar_lea.vmem %s323, 129 [#allocation3]
        %v348 = vld [vmem:[%s347] ss:$2 sm:$0xff]
        %s349 = scalar_lea.vmem %s323, 161 [#allocation3]
        %v350 = vld [vmem:[%s349] ss:$2 sm:$0xff]
        %s351 = scalar_lea.vmem %s323, 193 [#allocation3]
        %v352 = vld [vmem:[%s351] ss:$2 sm:$0xff]
        %s353 = scalar_lea.vmem %s323, 225 [#allocation3]
        %v354 = vld [vmem:[%s353] ss:$2 sm:$0xff]
        %v355 = vmax.f32 %v292, %v308
        %v356 = vmax.f32 %v294, %v310
        %v357 = vmax.f32 %v296, %v312
        %v358 = vmax.f32 %v298, %v314
        %v359 = vmax.f32 %v300, %v316
        %v360 = vmax.f32 %v302, %v318
        %v361 = vmax.f32 %v304, %v320
        %v362 = vmax.f32 %v306, %v322
        %v363 = vmax.f32 %v324, %v340
        %v364 = vmax.f32 %v326, %v342
        %v365 = vmax.f32 %v328, %v344
        %v366 = vmax.f32 %v330, %v346
        %v367 = vmax.f32 %v332, %v348
        %v368 = vmax.f32 %v334, %v350
        %v369 = vmax.f32 %v336, %v352
        %v370 = vmax.f32 %v338, %v354
        %v371 = vmax.f32 %v355, %v363
        %v372 = vmax.f32 %v356, %v364
        %v373 = vmax.f32 %v357, %v365
        %v374 = vmax.f32 %v358, %v366
        %v375 = vmax.f32 %v359, %v367
        %v376 = vmax.f32 %v360, %v368
        %v377 = vmax.f32 %v361, %v369
        %v378 = vmax.f32 %v362, %v370
        %s379 = scalar_lea.vmem [#allocation2], 16
        %vm380 = vcmask 31744
        %381 = vst.msk [vmem:[%s379 + $0x1] sm:$0xff] %vm380, %v371
        %382 = vst.msk [vmem:[%s379 + $0x11] sm:$0xff] %vm380, %v372
        %383 = vst.msk [vmem:[%s379 + $0x21] sm:$0xff] %vm380, %v373
        %384 = vst.msk [vmem:[%s379 + $0x31] sm:$0xff] %vm380, %v374
        %385 = vst.msk [vmem:[%s379 + $0x41] sm:$0xff] %vm380, %v375
        %386 = vst.msk [vmem:[%s379 + $0x51] sm:$0xff] %vm380, %v376
        %387 = vst.msk [vmem:[%s379 + $0x61] sm:$0xff] %vm380, %v377
        %388 = vst.msk [vmem:[%s379 + $0x71] sm:$0xff] %vm380, %v378
        %v389 = vld [vmem:[#allocation2] sm:$0xff]
        %v390 = vld [vmem:[#allocation2 + $0x10] sm:$0xff]
        %v391 = vld [vmem:[#allocation2 + $0x20] sm:$0xff]
        %v392 = vld [vmem:[#allocation2 + $0x30] sm:$0xff]
        %v393 = vld [vmem:[#allocation2 + $0x40] sm:$0xff]
        %v394 = vld [vmem:[#allocation2 + $0x50] sm:$0xff]
        %v395 = vld [vmem:[#allocation2 + $0x60] sm:$0xff]
        %v396 = vld [vmem:[#allocation2 + $0x70] sm:$0xff]
        %v397 = vld [vmem:[#allocation6] sm:$0xf]
        %v398 = vld [vmem:[#allocation2 + $0x1] sm:$0xff]
        %v399 = vld [vmem:[#allocation2 + $0x11] sm:$0xff]
        %v400 = vld [vmem:[#allocation2 + $0x21] sm:$0xff]
        %v401 = vld [vmem:[#allocation2 + $0x31] sm:$0xff]
        %v402 = vld [vmem:[#allocation2 + $0x41] sm:$0xff]
        %v403 = vld [vmem:[#allocation2 + $0x51] sm:$0xff]
        %v404 = vld [vmem:[#allocation2 + $0x61] sm:$0xff]
        %v405 = vld [vmem:[#allocation2 + $0x71] sm:$0xff]
        %s406 = scalar_lea.vmem [#allocation6], 4
        %v407 = vld [vmem:[%s406] sm:$0xf]
        %v409 = vsel %vm380, %v398, 0
        %v412 = vsel %vm380, %v399, 0
        %v415 = vsel %vm380, %v400, 0
        %v418 = vsel %vm380, %v401, 0
        %v421 = vsel %vm380, %v402, 0
        %v424 = vsel %vm380, %v403, 0
        %v427 = vsel %vm380, %v404, 0
        %v430 = vsel %vm380, %v405, 0
        %vm432 = vcmask 1043456
        %v434 = vsel %vm432, %v407, 0
        %436 = vmatprep.subr.mxu0 0.0
        %437 = vmatpush1.msra.mxu0 %v434
        %438 = vmatprep.subr.mxu0 0.0
        %439 = vmatpush1.msra.mxu0 0.0
        %440 = vmatprep.subr.mxu0 0.0
        %441 = vmatpush1.msra.mxu0 0.0
        %442 = vmatprep.subr.mxu0 0.0
        %443 = vmatpush1.msra.mxu0 0.0
        %444 = vmatprep.subr.mxu0 0.0
        %445 = vmatpush1.msra.mxu0 0.0
        %446 = vmatprep.subr.mxu0 0.0
        %447 = vmatpush1.msra.mxu0 0.0
        %448 = vmatprep.subr.mxu0 0.0
        %449 = vmatpush1.msra.mxu0 0.0
        %450 = vmatprep.subr.mxu0 0.0
        %451 = vmatpush1.msra.mxu0 0.0
        %452 = vmatprep.subr.mxu0 0.0
        %453 = vmatpush1.msra.mxu0 0.0
        %454 = vmatprep.subr.mxu0 0.0
        %455 = vmatpush1.msra.mxu0 0.0
        %456 = vmatprep.subr.mxu0 0.0
        %457 = vmatpush1.msra.mxu0 0.0
        %458 = vmatprep.subr.mxu0 0.0
        %459 = vmatpush1.msra.mxu0 0.0
        %460 = vmatprep.subr.mxu0 0.0
        %461 = vmatpush1.msra.mxu0 0.0
        %462 = vmatprep.subr.mxu0 0.0
        %463 = vmatpush1.msra.mxu0 0.0
        %464 = vmatprep.subr.mxu0 0.0
        %465 = vmatpush1.msra.mxu0 0.0
        %466 = vmatprep.subr.mxu0 0.0
        %467 = vmatpush1.msra.mxu0 0.0
        %468 = vmatprep.subr.mxu0 0.0
        %469 = vmatpush1.msra.mxu0 0.0
        %470 = vmatprep.subr.mxu0 0.0
        %471 = vmatpush1.msra.mxu0 0.0
        %472 = vmatprep.subr.mxu0 0.0
        %473 = vmatpush1.msra.mxu0 0.0
        %474 = vmatprep.subr.mxu0 0.0
        %475 = vmatpush1.msra.mxu0 0.0
        %476 = vmatprep.subr.mxu0 0.0
        %477 = vmatpush1.msra.mxu0 0.0
        %478 = vmatprep.subr.mxu0 0.0
        %479 = vmatpush1.msra.mxu0 0.0
        %480 = vmatprep.subr.mxu0 0.0
        %481 = vmatpush1.msra.mxu0 0.0
        %482 = vmatprep.subr.mxu0 0.0
        %483 = vmatpush1.msra.mxu0 0.0
        %484 = vmatprep.subr.mxu0 0.0
        %485 = vmatpush1.msra.mxu0 0.0
        %486 = vmatprep.subr.mxu0 0.0
        %487 = vmatpush1.msra.mxu0 0.0
        %488 = vmatprep.subr.mxu0 0.0
        %489 = vmatpush1.msra.mxu0 0.0
        %490 = vmatprep.subr.mxu0 0.0
        %491 = vmatpush1.msra.mxu0 0.0
        %492 = vmatprep.subr.mxu0 0.0
        %493 = vmatpush1.msra.mxu0 0.0
        %494 = vmatprep.subr.mxu0 0.0
        %495 = vmatpush1.msra.mxu0 0.0
        %496 = vmatprep.subr.mxu0 0.0
        %497 = vmatpush1.msra.mxu0 0.0
        %498 = vmatprep.subr.mxu0 0.0
        %499 = vmatpush1.msra.mxu0 0.0
        %500 = vmatprep.mubr.f32.mxu0 0.0
        %501 = vmatmul.mubr.f32.gmra.mrb[0].mxu0 %v409
        %v502 = vpop.f32.mrb[0].mxu0
        %v503 = vadd.f32 0.0, %v502
        %v504 = vpop.f32.mrb[0].mxu0
        %505 = vmatprep.mubr.f32.mxu0 0.0
        %506 = vmatmul.mubr.f32.gmra.mrb[0].mxu0 %v412
        %v507 = vpop.f32.mrb[0].mxu0
        %v508 = vadd.f32 0.0, %v507
        %v509 = vpop.f32.mrb[0].mxu0
        %510 = vmatprep.mubr.f32.mxu0 0.0
        %511 = vmatmul.mubr.f32.gmra.mrb[0].mxu0 %v415
        %v512 = vpop.f32.mrb[0].mxu0
        %v513 = vadd.f32 0.0, %v512
        %v514 = vpop.f32.mrb[0].mxu0
        %515 = vmatprep.mubr.f32.mxu0 0.0
        %516 = vmatmul.mubr.f32.gmra.mrb[0].mxu0 %v418
        %v517 = vpop.f32.mrb[0].mxu0
        %v518 = vadd.f32 0.0, %v517
        %v519 = vpop.f32.mrb[0].mxu0
        %520 = vmatprep.mubr.f32.mxu0 0.0
        %521 = vmatmul.mubr.f32.gmra.mrb[0].mxu0 %v421
        %v522 = vpop.f32.mrb[0].mxu0
        %v523 = vadd.f32 0.0, %v522
        %v524 = vpop.f32.mrb[0].mxu0
        %525 = vmatprep.mubr.f32.mxu0 0.0
        %526 = vmatmul.mubr.f32.gmra.mrb[0].mxu0 %v424
        %v527 = vpop.f32.mrb[0].mxu0
        %v528 = vadd.f32 0.0, %v527
        %v529 = vpop.f32.mrb[0].mxu0
        %530 = vmatprep.mubr.f32.mxu0 0.0
        %531 = vmatmul.mubr.f32.gmra.mrb[0].mxu0 %v427
        %v532 = vpop.f32.mrb[0].mxu0
        %v533 = vadd.f32 0.0, %v532
        %v534 = vpop.f32.mrb[0].mxu0
        %535 = vmatprep.mubr.f32.mxu0 0.0
        %536 = vmatmul.mubr.f32.gmra.mrb[0].mxu0 %v430
        %v537 = vpop.f32.mrb[0].mxu0
        %v538 = vadd.f32 0.0, %v537
        %v539 = vpop.f32.mrb[0].mxu0
        %540 = vdwg.mxu0
        %v542 = vsel %vm380, %v389, 0
        %v545 = vsel %vm380, %v390, 0
        %v548 = vsel %vm380, %v391, 0
        %v551 = vsel %vm380, %v392, 0
        %v554 = vsel %vm380, %v393, 0
        %v557 = vsel %vm380, %v394, 0
        %v560 = vsel %vm380, %v395, 0
        %v563 = vsel %vm380, %v396, 0
        %v566 = vsel %vm432, %v397, 0
        %568 = vmatprep.subr.mxu0 0.0
        %569 = vmatpush1.msra.mxu0 %v566
        %570 = vmatprep.subr.mxu0 0.0
        %571 = vmatpush1.msra.mxu0 0.0
        %572 = vmatprep.subr.mxu0 0.0
        %573 = vmatpush1.msra.mxu0 0.0
        %574 = vmatprep.subr.mxu0 0.0
        %575 = vmatpush1.msra.mxu0 0.0
        %576 = vmatprep.subr.mxu0 0.0
        %577 = vmatpush1.msra.mxu0 0.0
        %578 = vmatprep.subr.mxu0 0.0
        %579 = vmatpush1.msra.mxu0 0.0
        %580 = vmatprep.subr.mxu0 0.0
        %581 = vmatpush1.msra.mxu0 0.0
        %582 = vmatprep.subr.mxu0 0.0
        %583 = vmatpush1.msra.mxu0 0.0
        %584 = vmatprep.subr.mxu0 0.0
        %585 = vmatpush1.msra.mxu0 0.0
        %586 = vmatprep.subr.mxu0 0.0
        %587 = vmatpush1.msra.mxu0 0.0
        %588 = vmatprep.subr.mxu0 0.0
        %589 = vmatpush1.msra.mxu0 0.0
        %590 = vmatprep.subr.mxu0 0.0
        %591 = vmatpush1.msra.mxu0 0.0
        %592 = vmatprep.subr.mxu0 0.0
        %593 = vmatpush1.msra.mxu0 0.0
        %594 = vmatprep.subr.mxu0 0.0
        %595 = vmatpush1.msra.mxu0 0.0
        %596 = vmatprep.subr.mxu0 0.0
        %597 = vmatpush1.msra.mxu0 0.0
        %598 = vmatprep.subr.mxu0 0.0
        %599 = vmatpush1.msra.mxu0 0.0
        %600 = vmatprep.subr.mxu0 0.0
        %601 = vmatpush1.msra.mxu0 0.0
        %602 = vmatprep.subr.mxu0 0.0
        %603 = vmatpush1.msra.mxu0 0.0
        %604 = vmatprep.subr.mxu0 0.0
        %605 = vmatpush1.msra.mxu0 0.0
        %606 = vmatprep.subr.mxu0 0.0
        %607 = vmatpush1.msra.mxu0 0.0
        %608 = vmatprep.subr.mxu0 0.0
        %609 = vmatpush1.msra.mxu0 0.0
        %610 = vmatprep.subr.mxu0 0.0
        %611 = vmatpush1.msra.mxu0 0.0
        %612 = vmatprep.subr.mxu0 0.0
        %613 = vmatpush1.msra.mxu0 0.0
        %614 = vmatprep.subr.mxu0 0.0
        %615 = vmatpush1.msra.mxu0 0.0
        %616 = vmatprep.subr.mxu0 0.0
        %617 = vmatpush1.msra.mxu0 0.0
        %618 = vmatprep.subr.mxu0 0.0
        %619 = vmatpush1.msra.mxu0 0.0
        %620 = vmatprep.subr.mxu0 0.0
        %621 = vmatpush1.msra.mxu0 0.0
        %622 = vmatprep.subr.mxu0 0.0
        %623 = vmatpush1.msra.mxu0 0.0
        %624 = vmatprep.subr.mxu0 0.0
        %625 = vmatpush1.msra.mxu0 0.0
        %626 = vmatprep.subr.mxu0 0.0
        %627 = vmatpush1.msra.mxu0 0.0
        %628 = vmatprep.subr.mxu0 0.0
        %629 = vmatpush1.msra.mxu0 0.0
        %630 = vmatprep.subr.mxu0 0.0
        %631 = vmatpush1.msra.mxu0 0.0
        %632 = vmatprep.mubr.f32.mxu0 0.0
        %633 = vmatmul.mubr.f32.gmra.mrb[0].mxu0 %v542
        %v634 = vpop.f32.mrb[0].mxu0
        %v635 = vadd.f32 %v503, %v634
        %v636 = vpop.f32.mrb[0].mxu0
        %637 = vmatprep.mubr.f32.mxu0 0.0
        %638 = vmatmul.mubr.f32.gmra.mrb[0].mxu0 %v545
        %v639 = vpop.f32.mrb[0].mxu0
        %v640 = vadd.f32 %v508, %v639
        %v641 = vpop.f32.mrb[0].mxu0
        %642 = vmatprep.mubr.f32.mxu0 0.0
        %643 = vmatmul.mubr.f32.gmra.mrb[0].mxu0 %v548
        %v644 = vpop.f32.mrb[0].mxu0
        %v645 = vadd.f32 %v513, %v644
        %v646 = vpop.f32.mrb[0].mxu0
        %647 = vmatprep.mubr.f32.mxu0 0.0
        %648 = vmatmul.mubr.f32.gmra.mrb[0].mxu0 %v551
        %v649 = vpop.f32.mrb[0].mxu0
        %v650 = vadd.f32 %v518, %v649
        %v651 = vpop.f32.mrb[0].mxu0
        %652 = vmatprep.mubr.f32.mxu0 0.0
        %653 = vmatmul.mubr.f32.gmra.mrb[0].mxu0 %v554
        %v654 = vpop.f32.mrb[0].mxu0
        %v655 = vadd.f32 %v523, %v654
        %v656 = vpop.f32.mrb[0].mxu0
        %657 = vmatprep.mubr.f32.mxu0 0.0
        %658 = vmatmul.mubr.f32.gmra.mrb[0].mxu0 %v557
        %v659 = vpop.f32.mrb[0].mxu0
        %v660 = vadd.f32 %v528, %v659
        %v661 = vpop.f32.mrb[0].mxu0
        %662 = vmatprep.mubr.f32.mxu0 0.0
        %663 = vmatmul.mubr.f32.gmra.mrb[0].mxu0 %v560
        %v664 = vpop.f32.mrb[0].mxu0
        %v665 = vadd.f32 %v533, %v664
        %v666 = vpop.f32.mrb[0].mxu0
        %667 = vmatprep.mubr.f32.mxu0 0.0
        %668 = vmatmul.mubr.f32.gmra.mrb[0].mxu0 %v563
        %v669 = vpop.f32.mrb[0].mxu0
        %v670 = vadd.f32 %v538, %v669
        %v671 = vpop.f32.mrb[0].mxu0
        %672 = vdwg.mxu0
        %v673 = vld [vmem:[#allocation2 + $0x2] sm:$0xff]
        %v674 = vld [vmem:[#allocation2 + $0x12] sm:$0xff]
        %v675 = vld [vmem:[#allocation2 + $0x22] sm:$0xff]
        %v676 = vld [vmem:[#allocation2 + $0x32] sm:$0xff]
        %v677 = vld [vmem:[#allocation2 + $0x42] sm:$0xff]
        %v678 = vld [vmem:[#allocation2 + $0x52] sm:$0xff]
        %v679 = vld [vmem:[#allocation2 + $0x62] sm:$0xff]
        %v680 = vld [vmem:[#allocation2 + $0x72] sm:$0xff]
        %s681 = scalar_lea.vmem [#allocation6], 8
        %v682 = vld [vmem:[%s681] sm:$0xf]
        %v684 = vsel %vm380, %v673, 0
        %v687 = vsel %vm380, %v674, 0
        %v690 = vsel %vm380, %v675, 0
        %v693 = vsel %vm380, %v676, 0
        %v696 = vsel %vm380, %v677, 0
        %v699 = vsel %vm380, %v678, 0
        %v702 = vsel %vm380, %v679, 0
        %v705 = vsel %vm380, %v680, 0
        %v708 = vsel %vm432, %v682, 0
        %710 = vmatprep.subr.mxu0 0.0
        %711 = vmatpush1.msra.mxu0 %v708
        %712 = vmatprep.subr.mxu0 0.0
        %713 = vmatpush1.msra.mxu0 0.0
        %714 = vmatprep.subr.mxu0 0.0
        %715 = vmatpush1.msra.mxu0 0.0
        %716 = vmatprep.subr.mxu0 0.0
        %717 = vmatpush1.msra.mxu0 0.0
        %718 = vmatprep.subr.mxu0 0.0
        %719 = vmatpush1.msra.mxu0 0.0
        %720 = vmatprep.subr.mxu0 0.0
        %721 = vmatpush1.msra.mxu0 0.0
        %722 = vmatprep.subr.mxu0 0.0
        %723 = vmatpush1.msra.mxu0 0.0
        %724 = vmatprep.subr.mxu0 0.0
        %725 = vmatpush1.msra.mxu0 0.0
        %726 = vmatprep.subr.mxu0 0.0
        %727 = vmatpush1.msra.mxu0 0.0
        %728 = vmatprep.subr.mxu0 0.0
        %729 = vmatpush1.msra.mxu0 0.0
        %730 = vmatprep.subr.mxu0 0.0
        %731 = vmatpush1.msra.mxu0 0.0
        %732 = vmatprep.subr.mxu0 0.0
        %733 = vmatpush1.msra.mxu0 0.0
        %734 = vmatprep.subr.mxu0 0.0
        %735 = vmatpush1.msra.mxu0 0.0
        %736 = vmatprep.subr.mxu0 0.0
        %737 = vmatpush1.msra.mxu0 0.0
        %738 = vmatprep.subr.mxu0 0.0
        %739 = vmatpush1.msra.mxu0 0.0
        %740 = vmatprep.subr.mxu0 0.0
        %741 = vmatpush1.msra.mxu0 0.0
        %742 = vmatprep.subr.mxu0 0.0
        %743 = vmatpush1.msra.mxu0 0.0
        %744 = vmatprep.subr.mxu0 0.0
        %745 = vmatpush1.msra.mxu0 0.0
        %746 = vmatprep.subr.mxu0 0.0
        %747 = vmatpush1.msra.mxu0 0.0
        %748 = vmatprep.subr.mxu0 0.0
        %749 = vmatpush1.msra.mxu0 0.0
        %750 = vmatprep.subr.mxu0 0.0
        %751 = vmatpush1.msra.mxu0 0.0
        %752 = vmatprep.subr.mxu0 0.0
        %753 = vmatpush1.msra.mxu0 0.0
        %754 = vmatprep.subr.mxu0 0.0
        %755 = vmatpush1.msra.mxu0 0.0
        %756 = vmatprep.subr.mxu0 0.0
        %757 = vmatpush1.msra.mxu0 0.0
        %758 = vmatprep.subr.mxu0 0.0
        %759 = vmatpush1.msra.mxu0 0.0
        %760 = vmatprep.subr.mxu0 0.0
        %761 = vmatpush1.msra.mxu0 0.0
        %762 = vmatprep.subr.mxu0 0.0
        %763 = vmatpush1.msra.mxu0 0.0
        %764 = vmatprep.subr.mxu0 0.0
        %765 = vmatpush1.msra.mxu0 0.0
        %766 = vmatprep.subr.mxu0 0.0
        %767 = vmatpush1.msra.mxu0 0.0
        %768 = vmatprep.subr.mxu0 0.0
        %769 = vmatpush1.msra.mxu0 0.0
        %770 = vmatprep.subr.mxu0 0.0
        %771 = vmatpush1.msra.mxu0 0.0
        %772 = vmatprep.subr.mxu0 0.0
        %773 = vmatpush1.msra.mxu0 0.0
        %774 = vmatprep.mubr.f32.mxu0 0.0
        %775 = vmatmul.mubr.f32.gmra.mrb[0].mxu0 %v684
        %v776 = vpop.f32.mrb[0].mxu0
        %v777 = vadd.f32 0.0, %v776
        %v778 = vpop.f32.mrb[0].mxu0
        %779 = vmatprep.mubr.f32.mxu0 0.0
        %780 = vmatmul.mubr.f32.gmra.mrb[0].mxu0 %v687
        %v781 = vpop.f32.mrb[0].mxu0
        %v782 = vadd.f32 0.0, %v781
        %v783 = vpop.f32.mrb[0].mxu0
        %784 = vmatprep.mubr.f32.mxu0 0.0
        %785 = vmatmul.mubr.f32.gmra.mrb[0].mxu0 %v690
        %v786 = vpop.f32.mrb[0].mxu0
        %v787 = vadd.f32 0.0, %v786
        %v788 = vpop.f32.mrb[0].mxu0
        %789 = vmatprep.mubr.f32.mxu0 0.0
        %790 = vmatmul.mubr.f32.gmra.mrb[0].mxu0 %v693
        %v791 = vpop.f32.mrb[0].mxu0
        %v792 = vadd.f32 0.0, %v791
        %v793 = vpop.f32.mrb[0].mxu0
        %794 = vmatprep.mubr.f32.mxu0 0.0
        %795 = vmatmul.mubr.f32.gmra.mrb[0].mxu0 %v696
        %v796 = vpop.f32.mrb[0].mxu0
        %v797 = vadd.f32 0.0, %v796
        %v798 = vpop.f32.mrb[0].mxu0
        %799 = vmatprep.mubr.f32.mxu0 0.0
        %800 = vmatmul.mubr.f32.gmra.mrb[0].mxu0 %v699
        %v801 = vpop.f32.mrb[0].mxu0
        %v802 = vadd.f32 0.0, %v801
        %v803 = vpop.f32.mrb[0].mxu0
        %804 = vmatprep.mubr.f32.mxu0 0.0
        %805 = vmatmul.mubr.f32.gmra.mrb[0].mxu0 %v702
        %v806 = vpop.f32.mrb[0].mxu0
        %v807 = vadd.f32 0.0, %v806
        %v808 = vpop.f32.mrb[0].mxu0
        %809 = vmatprep.mubr.f32.mxu0 0.0
        %810 = vmatmul.mubr.f32.gmra.mrb[0].mxu0 %v705
        %v811 = vpop.f32.mrb[0].mxu0
        %v812 = vadd.f32 0.0, %v811
        %v813 = vpop.f32.mrb[0].mxu0
        %814 = vdwg.mxu0
        %v815 = vadd.f32 %v635, %v777
        %v816 = vadd.f32 %v640, %v782
        %v817 = vadd.f32 %v645, %v787
        %v818 = vadd.f32 %v650, %v792
        %v819 = vadd.f32 %v655, %v797
        %v820 = vadd.f32 %v660, %v802
        %v821 = vadd.f32 %v665, %v807
        %v822 = vadd.f32 %v670, %v812
        %v823 = vld [vmem:[%s379] sm:$0xff]
        %v824 = vld [vmem:[%s379 + $0x10] sm:$0xff]
        %v825 = vld [vmem:[%s379 + $0x20] sm:$0xff]
        %v826 = vld [vmem:[%s379 + $0x30] sm:$0xff]
        %v827 = vld [vmem:[%s379 + $0x40] sm:$0xff]
        %v828 = vld [vmem:[%s379 + $0x50] sm:$0xff]
        %v829 = vld [vmem:[%s379 + $0x60] sm:$0xff]
        %v830 = vld [vmem:[%s379 + $0x70] sm:$0xff]
        %s831 = scalar_lea.vmem [#allocation6], 12
        %v832 = vld [vmem:[%s831] sm:$0xf]
        %v834 = vsel %vm380, %v823, 0
        %v837 = vsel %vm380, %v824, 0
        %v840 = vsel %vm380, %v825, 0
        %v843 = vsel %vm380, %v826, 0
        %v846 = vsel %vm380, %v827, 0
        %v849 = vsel %vm380, %v828, 0
        %v852 = vsel %vm380, %v829, 0
        %v855 = vsel %vm380, %v830, 0
        %v858 = vsel %vm432, %v832, 0
        %860 = vmatprep.subr.mxu0 0.0
        %861 = vmatpush1.msra.mxu0 %v858
        %862 = vmatprep.subr.mxu0 0.0
        %863 = vmatpush1.msra.mxu0 0.0
        %864 = vmatprep.subr.mxu0 0.0
        %865 = vmatpush1.msra.mxu0 0.0
        %866 = vmatprep.subr.mxu0 0.0
        %867 = vmatpush1.msra.mxu0 0.0
        %868 = vmatprep.subr.mxu0 0.0
        %869 = vmatpush1.msra.mxu0 0.0
        %870 = vmatprep.subr.mxu0 0.0
        %871 = vmatpush1.msra.mxu0 0.0
        %872 = vmatprep.subr.mxu0 0.0
        %873 = vmatpush1.msra.mxu0 0.0
        %874 = vmatprep.subr.mxu0 0.0
        %875 = vmatpush1.msra.mxu0 0.0
        %876 = vmatprep.subr.mxu0 0.0
        %877 = vmatpush1.msra.mxu0 0.0
        %878 = vmatprep.subr.mxu0 0.0
        %879 = vmatpush1.msra.mxu0 0.0
        %880 = vmatprep.subr.mxu0 0.0
        %881 = vmatpush1.msra.mxu0 0.0
        %882 = vmatprep.subr.mxu0 0.0
        %883 = vmatpush1.msra.mxu0 0.0
        %884 = vmatprep.subr.mxu0 0.0
        %885 = vmatpush1.msra.mxu0 0.0
        %886 = vmatprep.subr.mxu0 0.0
        %887 = vmatpush1.msra.mxu0 0.0
        %888 = vmatprep.subr.mxu0 0.0
        %889 = vmatpush1.msra.mxu0 0.0
        %890 = vmatprep.subr.mxu0 0.0
        %891 = vmatpush1.msra.mxu0 0.0
        %892 = vmatprep.subr.mxu0 0.0
        %893 = vmatpush1.msra.mxu0 0.0
        %894 = vmatprep.subr.mxu0 0.0
        %895 = vmatpush1.msra.mxu0 0.0
        %896 = vmatprep.subr.mxu0 0.0
        %897 = vmatpush1.msra.mxu0 0.0
        %898 = vmatprep.subr.mxu0 0.0
        %899 = vmatpush1.msra.mxu0 0.0
        %900 = vmatprep.subr.mxu0 0.0
        %901 = vmatpush1.msra.mxu0 0.0
        %902 = vmatprep.subr.mxu0 0.0
        %903 = vmatpush1.msra.mxu0 0.0
        %904 = vmatprep.subr.mxu0 0.0
        %905 = vmatpush1.msra.mxu0 0.0
        %906 = vmatprep.subr.mxu0 0.0
        %907 = vmatpush1.msra.mxu0 0.0
        %908 = vmatprep.subr.mxu0 0.0
        %909 = vmatpush1.msra.mxu0 0.0
        %910 = vmatprep.subr.mxu0 0.0
        %911 = vmatpush1.msra.mxu0 0.0
        %912 = vmatprep.subr.mxu0 0.0
        %913 = vmatpush1.msra.mxu0 0.0
        %914 = vmatprep.subr.mxu0 0.0
        %915 = vmatpush1.msra.mxu0 0.0
        %916 = vmatprep.subr.mxu0 0.0
        %917 = vmatpush1.msra.mxu0 0.0
        %918 = vmatprep.subr.mxu0 0.0
        %919 = vmatpush1.msra.mxu0 0.0
        %920 = vmatprep.subr.mxu0 0.0
        %921 = vmatpush1.msra.mxu0 0.0
        %922 = vmatprep.subr.mxu0 0.0
        %923 = vmatpush1.msra.mxu0 0.0
        %924 = vmatprep.mubr.f32.mxu0 0.0
        %925 = vmatmul.mubr.f32.gmra.mrb[0].mxu0 %v834
        %v926 = vpop.f32.mrb[0].mxu0
        %v927 = vadd.f32 0.0, %v926
        %v928 = vpop.f32.mrb[0].mxu0
        %929 = vmatprep.mubr.f32.mxu0 0.0
        %930 = vmatmul.mubr.f32.gmra.mrb[0].mxu0 %v837
        %v931 = vpop.f32.mrb[0].mxu0
        %v932 = vadd.f32 0.0, %v931
        %v933 = vpop.f32.mrb[0].mxu0
        %934 = vmatprep.mubr.f32.mxu0 0.0
        %935 = vmatmul.mubr.f32.gmra.mrb[0].mxu0 %v840
        %v936 = vpop.f32.mrb[0].mxu0
        %v937 = vadd.f32 0.0, %v936
        %v938 = vpop.f32.mrb[0].mxu0
        %939 = vmatprep.mubr.f32.mxu0 0.0
        %940 = vmatmul.mubr.f32.gmra.mrb[0].mxu0 %v843
        %v941 = vpop.f32.mrb[0].mxu0
        %v942 = vadd.f32 0.0, %v941
        %v943 = vpop.f32.mrb[0].mxu0
        %944 = vmatprep.mubr.f32.mxu0 0.0
        %945 = vmatmul.mubr.f32.gmra.mrb[0].mxu0 %v846
        %v946 = vpop.f32.mrb[0].mxu0
        %v947 = vadd.f32 0.0, %v946
        %v948 = vpop.f32.mrb[0].mxu0
        %949 = vmatprep.mubr.f32.mxu0 0.0
        %950 = vmatmul.mubr.f32.gmra.mrb[0].mxu0 %v849
        %v951 = vpop.f32.mrb[0].mxu0
        %v952 = vadd.f32 0.0, %v951
        %v953 = vpop.f32.mrb[0].mxu0
        %954 = vmatprep.mubr.f32.mxu0 0.0
        %955 = vmatmul.mubr.f32.gmra.mrb[0].mxu0 %v852
        %v956 = vpop.f32.mrb[0].mxu0
        %v957 = vadd.f32 0.0, %v956
        %v958 = vpop.f32.mrb[0].mxu0
        %959 = vmatprep.mubr.f32.mxu0 0.0
        %960 = vmatmul.mubr.f32.gmra.mrb[0].mxu0 %v855
        %v961 = vpop.f32.mrb[0].mxu0
        %v962 = vadd.f32 0.0, %v961
        %v963 = vpop.f32.mrb[0].mxu0
        %964 = vdwg.mxu0
        %v965 = vadd.f32 %v815, %v927
        %v966 = vadd.f32 %v816, %v932
        %v967 = vadd.f32 %v817, %v937
        %v968 = vadd.f32 %v818, %v942
        %v969 = vadd.f32 %v819, %v947
        %v970 = vadd.f32 %v820, %v952
        %v971 = vadd.f32 %v821, %v957
        %v972 = vadd.f32 %v822, %v962
        %v973 = vld [vmem:[%s379 + $0x1] sm:$0xff]
        %v974 = vld [vmem:[%s379 + $0x11] sm:$0xff]
        %v975 = vld [vmem:[%s379 + $0x21] sm:$0xff]
        %v976 = vld [vmem:[%s379 + $0x31] sm:$0xff]
        %v977 = vld [vmem:[%s379 + $0x41] sm:$0xff]
        %v978 = vld [vmem:[%s379 + $0x51] sm:$0xff]
        %v979 = vld [vmem:[%s379 + $0x61] sm:$0xff]
        %v980 = vld [vmem:[%s379 + $0x71] sm:$0xff]
        %s981 = scalar_lea.vmem [#allocation6], 16
        %v982 = vld [vmem:[%s981] sm:$0xf]
        %v984 = vsel %vm380, %v973, 0
        %v987 = vsel %vm380, %v974, 0
        %v990 = vsel %vm380, %v975, 0
        %v993 = vsel %vm380, %v976, 0
        %v996 = vsel %vm380, %v977, 0
        %v999 = vsel %vm380, %v978, 0
        %v1002 = vsel %vm380, %v979, 0
        %v1005 = vsel %vm380, %v980, 0
        %v1008 = vsel %vm432, %v982, 0
        %1010 = vmatprep.subr.mxu0 0.0
        %1011 = vmatpush1.msra.mxu0 %v1008
        %1012 = vmatprep.subr.mxu0 0.0
        %1013 = vmatpush1.msra.mxu0 0.0
        %1014 = vmatprep.subr.mxu0 0.0
        %1015 = vmatpush1.msra.mxu0 0.0
        %1016 = vmatprep.subr.mxu0 0.0
        %1017 = vmatpush1.msra.mxu0 0.0
        %1018 = vmatprep.subr.mxu0 0.0
        %1019 = vmatpush1.msra.mxu0 0.0
        %1020 = vmatprep.subr.mxu0 0.0
        %1021 = vmatpush1.msra.mxu0 0.0
        %1022 = vmatprep.subr.mxu0 0.0
        %1023 = vmatpush1.msra.mxu0 0.0
        %1024 = vmatprep.subr.mxu0 0.0
        %1025 = vmatpush1.msra.mxu0 0.0
        %1026 = vmatprep.subr.mxu0 0.0
        %1027 = vmatpush1.msra.mxu0 0.0
        %1028 = vmatprep.subr.mxu0 0.0
        %1029 = vmatpush1.msra.mxu0 0.0
        %1030 = vmatprep.subr.mxu0 0.0
        %1031 = vmatpush1.msra.mxu0 0.0
        %1032 = vmatprep.subr.mxu0 0.0
        %1033 = vmatpush1.msra.mxu0 0.0
        %1034 = vmatprep.subr.mxu0 0.0
        %1035 = vmatpush1.msra.mxu0 0.0
        %1036 = vmatprep.subr.mxu0 0.0
        %1037 = vmatpush1.msra.mxu0 0.0
        %1038 = vmatprep.subr.mxu0 0.0
        %1039 = vmatpush1.msra.mxu0 0.0
        %1040 = vmatprep.subr.mxu0 0.0
        %1041 = vmatpush1.msra.mxu0 0.0
        %1042 = vmatprep.subr.mxu0 0.0
        %1043 = vmatpush1.msra.mxu0 0.0
        %1044 = vmatprep.subr.mxu0 0.0
        %1045 = vmatpush1.msra.mxu0 0.0
        %1046 = vmatprep.subr.mxu0 0.0
        %1047 = vmatpush1.msra.mxu0 0.0
        %1048 = vmatprep.subr.mxu0 0.0
        %1049 = vmatpush1.msra.mxu0 0.0
        %1050 = vmatprep.subr.mxu0 0.0
        %1051 = vmatpush1.msra.mxu0 0.0
        %1052 = vmatprep.subr.mxu0 0.0
        %1053 = vmatpush1.msra.mxu0 0.0
        %1054 = vmatprep.subr.mxu0 0.0
        %1055 = vmatpush1.msra.mxu0 0.0
        %1056 = vmatprep.subr.mxu0 0.0
        %1057 = vmatpush1.msra.mxu0 0.0
        %1058 = vmatprep.subr.mxu0 0.0
        %1059 = vmatpush1.msra.mxu0 0.0
        %1060 = vmatprep.subr.mxu0 0.0
        %1061 = vmatpush1.msra.mxu0 0.0
        %1062 = vmatprep.subr.mxu0 0.0
        %1063 = vmatpush1.msra.mxu0 0.0
        %1064 = vmatprep.subr.mxu0 0.0
        %1065 = vmatpush1.msra.mxu0 0.0
        %1066 = vmatprep.subr.mxu0 0.0
        %1067 = vmatpush1.msra.mxu0 0.0
        %1068 = vmatprep.subr.mxu0 0.0
        %1069 = vmatpush1.msra.mxu0 0.0
        %1070 = vmatprep.subr.mxu0 0.0
        %1071 = vmatpush1.msra.mxu0 0.0
        %1072 = vmatprep.subr.mxu0 0.0
        %1073 = vmatpush1.msra.mxu0 0.0
        %1074 = vmatprep.mubr.f32.mxu0 0.0
        %1075 = vmatmul.mubr.f32.gmra.mrb[0].mxu0 %v984
        %v1076 = vpop.f32.mrb[0].mxu0
        %v1077 = vadd.f32 0.0, %v1076
        %v1078 = vpop.f32.mrb[0].mxu0
        %1079 = vmatprep.mubr.f32.mxu0 0.0
        %1080 = vmatmul.mubr.f32.gmra.mrb[0].mxu0 %v987
        %v1081 = vpop.f32.mrb[0].mxu0
        %v1082 = vadd.f32 0.0, %v1081
        %v1083 = vpop.f32.mrb[0].mxu0
        %1084 = vmatprep.mubr.f32.mxu0 0.0
        %1085 = vmatmul.mubr.f32.gmra.mrb[0].mxu0 %v990
        %v1086 = vpop.f32.mrb[0].mxu0
        %v1087 = vadd.f32 0.0, %v1086
        %v1088 = vpop.f32.mrb[0].mxu0
        %1089 = vmatprep.mubr.f32.mxu0 0.0
        %1090 = vmatmul.mubr.f32.gmra.mrb[0].mxu0 %v993
        %v1091 = vpop.f32.mrb[0].mxu0
        %v1092 = vadd.f32 0.0, %v1091
        %v1093 = vpop.f32.mrb[0].mxu0
        %1094 = vmatprep.mubr.f32.mxu0 0.0
        %1095 = vmatmul.mubr.f32.gmra.mrb[0].mxu0 %v996
        %v1096 = vpop.f32.mrb[0].mxu0
        %v1097 = vadd.f32 0.0, %v1096
        %v1098 = vpop.f32.mrb[0].mxu0
        %1099 = vmatprep.mubr.f32.mxu0 0.0
        %1100 = vmatmul.mubr.f32.gmra.mrb[0].mxu0 %v999
        %v1101 = vpop.f32.mrb[0].mxu0
        %v1102 = vadd.f32 0.0, %v1101
        %v1103 = vpop.f32.mrb[0].mxu0
        %1104 = vmatprep.mubr.f32.mxu0 0.0
        %1105 = vmatmul.mubr.f32.gmra.mrb[0].mxu0 %v1002
        %v1106 = vpop.f32.mrb[0].mxu0
        %v1107 = vadd.f32 0.0, %v1106
        %v1108 = vpop.f32.mrb[0].mxu0
        %1109 = vmatprep.mubr.f32.mxu0 0.0
        %1110 = vmatmul.mubr.f32.gmra.mrb[0].mxu0 %v1005
        %v1111 = vpop.f32.mrb[0].mxu0
        %v1112 = vadd.f32 0.0, %v1111
        %v1113 = vpop.f32.mrb[0].mxu0
        %1114 = vdwg.mxu0
        %v1115 = vadd.f32 %v965, %v1077
        %v1116 = vadd.f32 %v966, %v1082
        %v1117 = vadd.f32 %v967, %v1087
        %v1118 = vadd.f32 %v968, %v1092
        %v1119 = vadd.f32 %v969, %v1097
        %v1120 = vadd.f32 %v970, %v1102
        %v1121 = vadd.f32 %v971, %v1107
        %v1122 = vadd.f32 %v972, %v1112
        %v1123 = vld [vmem:[%s379 + $0x2] sm:$0xff]
        %v1124 = vld [vmem:[%s379 + $0x12] sm:$0xff]
        %v1125 = vld [vmem:[%s379 + $0x22] sm:$0xff]
        %v1126 = vld [vmem:[%s379 + $0x32] sm:$0xff]
        %v1127 = vld [vmem:[%s379 + $0x42] sm:$0xff]
        %v1128 = vld [vmem:[%s379 + $0x52] sm:$0xff]
        %v1129 = vld [vmem:[%s379 + $0x62] sm:$0xff]
        %v1130 = vld [vmem:[%s379 + $0x72] sm:$0xff]
        %s1131 = scalar_lea.vmem [#allocation6], 20
        %v1132 = vld [vmem:[%s1131] sm:$0xf]
        %v1134 = vsel %vm380, %v1123, 0
        %v1137 = vsel %vm380, %v1124, 0
        %v1140 = vsel %vm380, %v1125, 0
        %v1143 = vsel %vm380, %v1126, 0
        %v1146 = vsel %vm380, %v1127, 0
        %v1149 = vsel %vm380, %v1128, 0
        %v1152 = vsel %vm380, %v1129, 0
        %v1155 = vsel %vm380, %v1130, 0
        %v1158 = vsel %vm432, %v1132, 0
        %1160 = vmatprep.subr.mxu0 0.0
        %1161 = vmatpush1.msra.mxu0 %v1158
        %1162 = vmatprep.subr.mxu0 0.0
        %1163 = vmatpush1.msra.mxu0 0.0
        %1164 = vmatprep.subr.mxu0 0.0
        %1165 = vmatpush1.msra.mxu0 0.0
        %1166 = vmatprep.subr.mxu0 0.0
        %1167 = vmatpush1.msra.mxu0 0.0
        %1168 = vmatprep.subr.mxu0 0.0
        %1169 = vmatpush1.msra.mxu0 0.0
        %1170 = vmatprep.subr.mxu0 0.0
        %1171 = vmatpush1.msra.mxu0 0.0
        %1172 = vmatprep.subr.mxu0 0.0
        %1173 = vmatpush1.msra.mxu0 0.0
        %1174 = vmatprep.subr.mxu0 0.0
        %1175 = vmatpush1.msra.mxu0 0.0
        %1176 = vmatprep.subr.mxu0 0.0
        %1177 = vmatpush1.msra.mxu0 0.0
        %1178 = vmatprep.subr.mxu0 0.0
        %1179 = vmatpush1.msra.mxu0 0.0
        %1180 = vmatprep.subr.mxu0 0.0
        %1181 = vmatpush1.msra.mxu0 0.0
        %1182 = vmatprep.subr.mxu0 0.0
        %1183 = vmatpush1.msra.mxu0 0.0
        %1184 = vmatprep.subr.mxu0 0.0
        %1185 = vmatpush1.msra.mxu0 0.0
        %1186 = vmatprep.subr.mxu0 0.0
        %1187 = vmatpush1.msra.mxu0 0.0
        %1188 = vmatprep.subr.mxu0 0.0
        %1189 = vmatpush1.msra.mxu0 0.0
        %1190 = vmatprep.subr.mxu0 0.0
        %1191 = vmatpush1.msra.mxu0 0.0
        %1192 = vmatprep.subr.mxu0 0.0
        %1193 = vmatpush1.msra.mxu0 0.0
        %1194 = vmatprep.subr.mxu0 0.0
        %1195 = vmatpush1.msra.mxu0 0.0
        %1196 = vmatprep.subr.mxu0 0.0
        %1197 = vmatpush1.msra.mxu0 0.0
        %1198 = vmatprep.subr.mxu0 0.0
        %1199 = vmatpush1.msra.mxu0 0.0
        %1200 = vmatprep.subr.mxu0 0.0
        %1201 = vmatpush1.msra.mxu0 0.0
        %1202 = vmatprep.subr.mxu0 0.0
        %1203 = vmatpush1.msra.mxu0 0.0
        %1204 = vmatprep.subr.mxu0 0.0
        %1205 = vmatpush1.msra.mxu0 0.0
        %1206 = vmatprep.subr.mxu0 0.0
        %1207 = vmatpush1.msra.mxu0 0.0
        %1208 = vmatprep.subr.mxu0 0.0
        %1209 = vmatpush1.msra.mxu0 0.0
        %1210 = vmatprep.subr.mxu0 0.0
        %1211 = vmatpush1.msra.mxu0 0.0
        %1212 = vmatprep.subr.mxu0 0.0
        %1213 = vmatpush1.msra.mxu0 0.0
        %1214 = vmatprep.subr.mxu0 0.0
        %1215 = vmatpush1.msra.mxu0 0.0
        %1216 = vmatprep.subr.mxu0 0.0
        %1217 = vmatpush1.msra.mxu0 0.0
        %1218 = vmatprep.subr.mxu0 0.0
        %1219 = vmatpush1.msra.mxu0 0.0
        %1220 = vmatprep.subr.mxu0 0.0
        %1221 = vmatpush1.msra.mxu0 0.0
        %1222 = vmatprep.subr.mxu0 0.0
        %1223 = vmatpush1.msra.mxu0 0.0
        %1224 = vmatprep.mubr.f32.mxu0 0.0
        %1225 = vmatmul.mubr.f32.gmra.mrb[0].mxu0 %v1134
        %v1226 = vpop.f32.mrb[0].mxu0
        %v1227 = vadd.f32 0.0, %v1226
        %v1228 = vpop.f32.mrb[0].mxu0
        %1229 = vmatprep.mubr.f32.mxu0 0.0
        %1230 = vmatmul.mubr.f32.gmra.mrb[0].mxu0 %v1137
        %v1231 = vpop.f32.mrb[0].mxu0
        %v1232 = vadd.f32 0.0, %v1231
        %v1233 = vpop.f32.mrb[0].mxu0
        %1234 = vmatprep.mubr.f32.mxu0 0.0
        %1235 = vmatmul.mubr.f32.gmra.mrb[0].mxu0 %v1140
        %v1236 = vpop.f32.mrb[0].mxu0
        %v1237 = vadd.f32 0.0, %v1236
        %v1238 = vpop.f32.mrb[0].mxu0
        %1239 = vmatprep.mubr.f32.mxu0 0.0
        %1240 = vmatmul.mubr.f32.gmra.mrb[0].mxu0 %v1143
        %v1241 = vpop.f32.mrb[0].mxu0
        %v1242 = vadd.f32 0.0, %v1241
        %v1243 = vpop.f32.mrb[0].mxu0
        %1244 = vmatprep.mubr.f32.mxu0 0.0
        %1245 = vmatmul.mubr.f32.gmra.mrb[0].mxu0 %v1146
        %v1246 = vpop.f32.mrb[0].mxu0
        %v1247 = vadd.f32 0.0, %v1246
        %v1248 = vpop.f32.mrb[0].mxu0
        %1249 = vmatprep.mubr.f32.mxu0 0.0
        %1250 = vmatmul.mubr.f32.gmra.mrb[0].mxu0 %v1149
        %v1251 = vpop.f32.mrb[0].mxu0
        %v1252 = vadd.f32 0.0, %v1251
        %v1253 = vpop.f32.mrb[0].mxu0
        %1254 = vmatprep.mubr.f32.mxu0 0.0
        %1255 = vmatmul.mubr.f32.gmra.mrb[0].mxu0 %v1152
        %v1256 = vpop.f32.mrb[0].mxu0
        %v1257 = vadd.f32 0.0, %v1256
        %v1258 = vpop.f32.mrb[0].mxu0
        %1259 = vmatprep.mubr.f32.mxu0 0.0
        %1260 = vmatmul.mubr.f32.gmra.mrb[0].mxu0 %v1155
        %v1261 = vpop.f32.mrb[0].mxu0
        %v1262 = vadd.f32 0.0, %v1261
        %v1263 = vpop.f32.mrb[0].mxu0
        %1264 = vdwg.mxu0
        %v1265 = vadd.f32 %v1115, %v1227
        %v1266 = vadd.f32 %v1116, %v1232
        %v1267 = vadd.f32 %v1117, %v1237
        %v1268 = vadd.f32 %v1118, %v1242
        %v1269 = vadd.f32 %v1119, %v1247
        %v1270 = vadd.f32 %v1120, %v1252
        %v1271 = vadd.f32 %v1121, %v1257
        %v1272 = vadd.f32 %v1122, %v1262
        %s1273 = scalar_lea.vmem [#allocation2], 32
        %v1274 = vld [vmem:[%s1273] sm:$0xff]
        %v1275 = vld [vmem:[%s1273 + $0x10] sm:$0xff]
        %v1276 = vld [vmem:[%s1273 + $0x20] sm:$0xff]
        %v1277 = vld [vmem:[%s1273 + $0x30] sm:$0xff]
        %v1278 = vld [vmem:[%s1273 + $0x40] sm:$0xff]
        %v1279 = vld [vmem:[%s1273 + $0x50] sm:$0xff]
        %v1280 = vld [vmem:[%s1273 + $0x60] sm:$0xff]
        %v1281 = vld [vmem:[%s1273 + $0x70] sm:$0xff]
        %s1282 = scalar_lea.vmem [#allocation6], 24
        %v1283 = vld [vmem:[%s1282] sm:$0xf]
        %v1285 = vsel %vm380, %v1274, 0
        %v1288 = vsel %vm380, %v1275, 0
        %v1291 = vsel %vm380, %v1276, 0
        %v1294 = vsel %vm380, %v1277, 0
        %v1297 = vsel %vm380, %v1278, 0
        %v1300 = vsel %vm380, %v1279, 0
        %v1303 = vsel %vm380, %v1280, 0
        %v1306 = vsel %vm380, %v1281, 0
        %v1309 = vsel %vm432, %v1283, 0
        %1311 = vmatprep.subr.mxu0 0.0
        %1312 = vmatpush1.msra.mxu0 %v1309
        %1313 = vmatprep.subr.mxu0 0.0
        %1314 = vmatpush1.msra.mxu0 0.0
        %1315 = vmatprep.subr.mxu0 0.0
        %1316 = vmatpush1.msra.mxu0 0.0
        %1317 = vmatprep.subr.mxu0 0.0
        %1318 = vmatpush1.msra.mxu0 0.0
        %1319 = vmatprep.subr.mxu0 0.0
        %1320 = vmatpush1.msra.mxu0 0.0
        %1321 = vmatprep.subr.mxu0 0.0
        %1322 = vmatpush1.msra.mxu0 0.0
        %1323 = vmatprep.subr.mxu0 0.0
        %1324 = vmatpush1.msra.mxu0 0.0
        %1325 = vmatprep.subr.mxu0 0.0
        %1326 = vmatpush1.msra.mxu0 0.0
        %1327 = vmatprep.subr.mxu0 0.0
        %1328 = vmatpush1.msra.mxu0 0.0
        %1329 = vmatprep.subr.mxu0 0.0
        %1330 = vmatpush1.msra.mxu0 0.0
        %1331 = vmatprep.subr.mxu0 0.0
        %1332 = vmatpush1.msra.mxu0 0.0
        %1333 = vmatprep.subr.mxu0 0.0
        %1334 = vmatpush1.msra.mxu0 0.0
        %1335 = vmatprep.subr.mxu0 0.0
        %1336 = vmatpush1.msra.mxu0 0.0
        %1337 = vmatprep.subr.mxu0 0.0
        %1338 = vmatpush1.msra.mxu0 0.0
        %1339 = vmatprep.subr.mxu0 0.0
        %1340 = vmatpush1.msra.mxu0 0.0
        %1341 = vmatprep.subr.mxu0 0.0
        %1342 = vmatpush1.msra.mxu0 0.0
        %1343 = vmatprep.subr.mxu0 0.0
        %1344 = vmatpush1.msra.mxu0 0.0
        %1345 = vmatprep.subr.mxu0 0.0
        %1346 = vmatpush1.msra.mxu0 0.0
        %1347 = vmatprep.subr.mxu0 0.0
        %1348 = vmatpush1.msra.mxu0 0.0
        %1349 = vmatprep.subr.mxu0 0.0
        %1350 = vmatpush1.msra.mxu0 0.0
        %1351 = vmatprep.subr.mxu0 0.0
        %1352 = vmatpush1.msra.mxu0 0.0
        %1353 = vmatprep.subr.mxu0 0.0
        %1354 = vmatpush1.msra.mxu0 0.0
        %1355 = vmatprep.subr.mxu0 0.0
        %1356 = vmatpush1.msra.mxu0 0.0
        %1357 = vmatprep.subr.mxu0 0.0
        %1358 = vmatpush1.msra.mxu0 0.0
        %1359 = vmatprep.subr.mxu0 0.0
        %1360 = vmatpush1.msra.mxu0 0.0
        %1361 = vmatprep.subr.mxu0 0.0
        %1362 = vmatpush1.msra.mxu0 0.0
        %1363 = vmatprep.subr.mxu0 0.0
        %1364 = vmatpush1.msra.mxu0 0.0
        %1365 = vmatprep.subr.mxu0 0.0
        %1366 = vmatpush1.msra.mxu0 0.0
        %1367 = vmatprep.subr.mxu0 0.0
        %1368 = vmatpush1.msra.mxu0 0.0
        %1369 = vmatprep.subr.mxu0 0.0
        %1370 = vmatpush1.msra.mxu0 0.0
        %1371 = vmatprep.subr.mxu0 0.0
        %1372 = vmatpush1.msra.mxu0 0.0
        %1373 = vmatprep.subr.mxu0 0.0
        %1374 = vmatpush1.msra.mxu0 0.0
        %1375 = vmatprep.mubr.f32.mxu0 0.0
        %1376 = vmatmul.mubr.f32.gmra.mrb[0].mxu0 %v1285
        %v1377 = vpop.f32.mrb[0].mxu0
        %v1378 = vadd.f32 0.0, %v1377
        %v1379 = vpop.f32.mrb[0].mxu0
        %1380 = vmatprep.mubr.f32.mxu0 0.0
        %1381 = vmatmul.mubr.f32.gmra.mrb[0].mxu0 %v1288
        %v1382 = vpop.f32.mrb[0].mxu0
        %v1383 = vadd.f32 0.0, %v1382
        %v1384 = vpop.f32.mrb[0].mxu0
        %1385 = vmatprep.mubr.f32.mxu0 0.0
        %1386 = vmatmul.mubr.f32.gmra.mrb[0].mxu0 %v1291
        %v1387 = vpop.f32.mrb[0].mxu0
        %v1388 = vadd.f32 0.0, %v1387
        %v1389 = vpop.f32.mrb[0].mxu0
        %1390 = vmatprep.mubr.f32.mxu0 0.0
        %1391 = vmatmul.mubr.f32.gmra.mrb[0].mxu0 %v1294
        %v1392 = vpop.f32.mrb[0].mxu0
        %v1393 = vadd.f32 0.0, %v1392
        %v1394 = vpop.f32.mrb[0].mxu0
        %1395 = vmatprep.mubr.f32.mxu0 0.0
        %1396 = vmatmul.mubr.f32.gmra.mrb[0].mxu0 %v1297
        %v1397 = vpop.f32.mrb[0].mxu0
        %v1398 = vadd.f32 0.0, %v1397
        %v1399 = vpop.f32.mrb[0].mxu0
        %1400 = vmatprep.mubr.f32.mxu0 0.0
        %1401 = vmatmul.mubr.f32.gmra.mrb[0].mxu0 %v1300
        %v1402 = vpop.f32.mrb[0].mxu0
        %v1403 = vadd.f32 0.0, %v1402
        %v1404 = vpop.f32.mrb[0].mxu0
        %1405 = vmatprep.mubr.f32.mxu0 0.0
        %1406 = vmatmul.mubr.f32.gmra.mrb[0].mxu0 %v1303
        %v1407 = vpop.f32.mrb[0].mxu0
        %v1408 = vadd.f32 0.0, %v1407
        %v1409 = vpop.f32.mrb[0].mxu0
        %1410 = vmatprep.mubr.f32.mxu0 0.0
        %1411 = vmatmul.mubr.f32.gmra.mrb[0].mxu0 %v1306
        %v1412 = vpop.f32.mrb[0].mxu0
        %v1413 = vadd.f32 0.0, %v1412
        %v1414 = vpop.f32.mrb[0].mxu0
        %1415 = vdwg.mxu0
        %v1416 = vadd.f32 %v1265, %v1378
        %v1417 = vadd.f32 %v1266, %v1383
        %v1418 = vadd.f32 %v1267, %v1388
        %v1419 = vadd.f32 %v1268, %v1393
        %v1420 = vadd.f32 %v1269, %v1398
        %v1421 = vadd.f32 %v1270, %v1403
        %v1422 = vadd.f32 %v1271, %v1408
        %v1423 = vadd.f32 %v1272, %v1413
        %v1424 = vld [vmem:[%s1273 + $0x1] sm:$0xff]
        %v1425 = vld [vmem:[%s1273 + $0x11] sm:$0xff]
        %v1426 = vld [vmem:[%s1273 + $0x21] sm:$0xff]
        %v1427 = vld [vmem:[%s1273 + $0x31] sm:$0xff]
        %v1428 = vld [vmem:[%s1273 + $0x41] sm:$0xff]
        %v1429 = vld [vmem:[%s1273 + $0x51] sm:$0xff]
        %v1430 = vld [vmem:[%s1273 + $0x61] sm:$0xff]
        %v1431 = vld [vmem:[%s1273 + $0x71] sm:$0xff]
        %s1432 = scalar_lea.vmem [#allocation6], 28
        %v1433 = vld [vmem:[%s1432] sm:$0xf]
        %v1435 = vsel %vm380, %v1424, 0
        %v1438 = vsel %vm380, %v1425, 0
        %v1441 = vsel %vm380, %v1426, 0
        %v1444 = vsel %vm380, %v1427, 0
        %v1447 = vsel %vm380, %v1428, 0
        %v1450 = vsel %vm380, %v1429, 0
        %v1453 = vsel %vm380, %v1430, 0
        %v1456 = vsel %vm380, %v1431, 0
        %v1459 = vsel %vm432, %v1433, 0
        %1461 = vmatprep.subr.mxu0 0.0
        %1462 = vmatpush1.msra.mxu0 %v1459
        %1463 = vmatprep.subr.mxu0 0.0
        %1464 = vmatpush1.msra.mxu0 0.0
        %1465 = vmatprep.subr.mxu0 0.0
        %1466 = vmatpush1.msra.mxu0 0.0
        %1467 = vmatprep.subr.mxu0 0.0
        %1468 = vmatpush1.msra.mxu0 0.0
        %1469 = vmatprep.subr.mxu0 0.0
        %1470 = vmatpush1.msra.mxu0 0.0
        %1471 = vmatprep.subr.mxu0 0.0
        %1472 = vmatpush1.msra.mxu0 0.0
        %1473 = vmatprep.subr.mxu0 0.0
        %1474 = vmatpush1.msra.mxu0 0.0
        %1475 = vmatprep.subr.mxu0 0.0
        %1476 = vmatpush1.msra.mxu0 0.0
        %1477 = vmatprep.subr.mxu0 0.0
        %1478 = vmatpush1.msra.mxu0 0.0
        %1479 = vmatprep.subr.mxu0 0.0
        %1480 = vmatpush1.msra.mxu0 0.0
        %1481 = vmatprep.subr.mxu0 0.0
        %1482 = vmatpush1.msra.mxu0 0.0
        %1483 = vmatprep.subr.mxu0 0.0
        %1484 = vmatpush1.msra.mxu0 0.0
        %1485 = vmatprep.subr.mxu0 0.0
        %1486 = vmatpush1.msra.mxu0 0.0
        %1487 = vmatprep.subr.mxu0 0.0
        %1488 = vmatpush1.msra.mxu0 0.0
        %1489 = vmatprep.subr.mxu0 0.0
        %1490 = vmatpush1.msra.mxu0 0.0
        %1491 = vmatprep.subr.mxu0 0.0
        %1492 = vmatpush1.msra.mxu0 0.0
        %1493 = vmatprep.subr.mxu0 0.0
        %1494 = vmatpush1.msra.mxu0 0.0
        %1495 = vmatprep.subr.mxu0 0.0
        %1496 = vmatpush1.msra.mxu0 0.0
        %1497 = vmatprep.subr.mxu0 0.0
        %1498 = vmatpush1.msra.mxu0 0.0
        %1499 = vmatprep.subr.mxu0 0.0
        %1500 = vmatpush1.msra.mxu0 0.0
        %1501 = vmatprep.subr.mxu0 0.0
        %1502 = vmatpush1.msra.mxu0 0.0
        %1503 = vmatprep.subr.mxu0 0.0
        %1504 = vmatpush1.msra.mxu0 0.0
        %1505 = vmatprep.subr.mxu0 0.0
        %1506 = vmatpush1.msra.mxu0 0.0
        %1507 = vmatprep.subr.mxu0 0.0
        %1508 = vmatpush1.msra.mxu0 0.0
        %1509 = vmatprep.subr.mxu0 0.0
        %1510 = vmatpush1.msra.mxu0 0.0
        %1511 = vmatprep.subr.mxu0 0.0
        %1512 = vmatpush1.msra.mxu0 0.0
        %1513 = vmatprep.subr.mxu0 0.0
        %1514 = vmatpush1.msra.mxu0 0.0
        %1515 = vmatprep.subr.mxu0 0.0
        %1516 = vmatpush1.msra.mxu0 0.0
        %1517 = vmatprep.subr.mxu0 0.0
        %1518 = vmatpush1.msra.mxu0 0.0
        %1519 = vmatprep.subr.mxu0 0.0
        %1520 = vmatpush1.msra.mxu0 0.0
        %1521 = vmatprep.subr.mxu0 0.0
        %1522 = vmatpush1.msra.mxu0 0.0
        %1523 = vmatprep.subr.mxu0 0.0
        %1524 = vmatpush1.msra.mxu0 0.0
        %1525 = vmatprep.mubr.f32.mxu0 0.0
        %1526 = vmatmul.mubr.f32.gmra.mrb[0].mxu0 %v1435
        %v1527 = vpop.f32.mrb[0].mxu0
        %v1528 = vadd.f32 0.0, %v1527
        %v1529 = vpop.f32.mrb[0].mxu0
        %1530 = vmatprep.mubr.f32.mxu0 0.0
        %1531 = vmatmul.mubr.f32.gmra.mrb[0].mxu0 %v1438
        %v1532 = vpop.f32.mrb[0].mxu0
        %v1533 = vadd.f32 0.0, %v1532
        %v1534 = vpop.f32.mrb[0].mxu0
        %1535 = vmatprep.mubr.f32.mxu0 0.0
        %1536 = vmatmul.mubr.f32.gmra.mrb[0].mxu0 %v1441
        %v1537 = vpop.f32.mrb[0].mxu0
        %v1538 = vadd.f32 0.0, %v1537
        %v1539 = vpop.f32.mrb[0].mxu0
        %1540 = vmatprep.mubr.f32.mxu0 0.0
        %1541 = vmatmul.mubr.f32.gmra.mrb[0].mxu0 %v1444
        %v1542 = vpop.f32.mrb[0].mxu0
        %v1543 = vadd.f32 0.0, %v1542
        %v1544 = vpop.f32.mrb[0].mxu0
        %1545 = vmatprep.mubr.f32.mxu0 0.0
        %1546 = vmatmul.mubr.f32.gmra.mrb[0].mxu0 %v1447
        %v1547 = vpop.f32.mrb[0].mxu0
        %v1548 = vadd.f32 0.0, %v1547
        %v1549 = vpop.f32.mrb[0].mxu0
        %1550 = vmatprep.mubr.f32.mxu0 0.0
        %1551 = vmatmul.mubr.f32.gmra.mrb[0].mxu0 %v1450
        %v1552 = vpop.f32.mrb[0].mxu0
        %v1553 = vadd.f32 0.0, %v1552
        %v1554 = vpop.f32.mrb[0].mxu0
        %1555 = vmatprep.mubr.f32.mxu0 0.0
        %1556 = vmatmul.mubr.f32.gmra.mrb[0].mxu0 %v1453
        %v1557 = vpop.f32.mrb[0].mxu0
        %v1558 = vadd.f32 0.0, %v1557
        %v1559 = vpop.f32.mrb[0].mxu0
        %1560 = vmatprep.mubr.f32.mxu0 0.0
        %1561 = vmatmul.mubr.f32.gmra.mrb[0].mxu0 %v1456
        %v1562 = vpop.f32.mrb[0].mxu0
        %v1563 = vadd.f32 0.0, %v1562
        %v1564 = vpop.f32.mrb[0].mxu0
        %1565 = vdwg.mxu0
        %v1566 = vadd.f32 %v1416, %v1528
        %v1567 = vadd.f32 %v1417, %v1533
        %v1568 = vadd.f32 %v1418, %v1538
        %v1569 = vadd.f32 %v1419, %v1543
        %v1570 = vadd.f32 %v1420, %v1548
        %v1571 = vadd.f32 %v1421, %v1553
        %v1572 = vadd.f32 %v1422, %v1558
        %v1573 = vadd.f32 %v1423, %v1563
        %v1574 = vld [vmem:[%s1273 + $0x2] sm:$0xff]
        %v1575 = vld [vmem:[%s1273 + $0x12] sm:$0xff]
        %v1576 = vld [vmem:[%s1273 + $0x22] sm:$0xff]
        %v1577 = vld [vmem:[%s1273 + $0x32] sm:$0xff]
        %v1578 = vld [vmem:[%s1273 + $0x42] sm:$0xff]
        %v1579 = vld [vmem:[%s1273 + $0x52] sm:$0xff]
        %v1580 = vld [vmem:[%s1273 + $0x62] sm:$0xff]
        %v1581 = vld [vmem:[%s1273 + $0x72] sm:$0xff]
        %s1582 = scalar_lea.vmem [#allocation6], 32
        %v1583 = vld [vmem:[%s1582] sm:$0xf]
        %v1585 = vsel %vm380, %v1574, 0
        %v1588 = vsel %vm380, %v1575, 0
        %v1591 = vsel %vm380, %v1576, 0
        %v1594 = vsel %vm380, %v1577, 0
        %v1597 = vsel %vm380, %v1578, 0
        %v1600 = vsel %vm380, %v1579, 0
        %v1603 = vsel %vm380, %v1580, 0
        %v1606 = vsel %vm380, %v1581, 0
        %v1609 = vsel %vm432, %v1583, 0
        %1611 = vmatprep.subr.mxu0 0.0
        %1612 = vmatpush1.msra.mxu0 %v1609
        %1613 = vmatprep.subr.mxu0 0.0
        %1614 = vmatpush1.msra.mxu0 0.0
        %1615 = vmatprep.subr.mxu0 0.0
        %1616 = vmatpush1.msra.mxu0 0.0
        %1617 = vmatprep.subr.mxu0 0.0
        %1618 = vmatpush1.msra.mxu0 0.0
        %1619 = vmatprep.subr.mxu0 0.0
        %1620 = vmatpush1.msra.mxu0 0.0
        %1621 = vmatprep.subr.mxu0 0.0
        %1622 = vmatpush1.msra.mxu0 0.0
        %1623 = vmatprep.subr.mxu0 0.0
        %1624 = vmatpush1.msra.mxu0 0.0
        %1625 = vmatprep.subr.mxu0 0.0
        %1626 = vmatpush1.msra.mxu0 0.0
        %1627 = vmatprep.subr.mxu0 0.0
        %1628 = vmatpush1.msra.mxu0 0.0
        %1629 = vmatprep.subr.mxu0 0.0
        %1630 = vmatpush1.msra.mxu0 0.0
        %1631 = vmatprep.subr.mxu0 0.0
        %1632 = vmatpush1.msra.mxu0 0.0
        %1633 = vmatprep.subr.mxu0 0.0
        %1634 = vmatpush1.msra.mxu0 0.0
        %1635 = vmatprep.subr.mxu0 0.0
        %1636 = vmatpush1.msra.mxu0 0.0
        %1637 = vmatprep.subr.mxu0 0.0
        %1638 = vmatpush1.msra.mxu0 0.0
        %1639 = vmatprep.subr.mxu0 0.0
        %1640 = vmatpush1.msra.mxu0 0.0
        %1641 = vmatprep.subr.mxu0 0.0
        %1642 = vmatpush1.msra.mxu0 0.0
        %1643 = vmatprep.subr.mxu0 0.0
        %1644 = vmatpush1.msra.mxu0 0.0
        %1645 = vmatprep.subr.mxu0 0.0
        %1646 = vmatpush1.msra.mxu0 0.0
        %1647 = vmatprep.subr.mxu0 0.0
        %1648 = vmatpush1.msra.mxu0 0.0
        %1649 = vmatprep.subr.mxu0 0.0
        %1650 = vmatpush1.msra.mxu0 0.0
        %1651 = vmatprep.subr.mxu0 0.0
        %1652 = vmatpush1.msra.mxu0 0.0
        %1653 = vmatprep.subr.mxu0 0.0
        %1654 = vmatpush1.msra.mxu0 0.0
        %1655 = vmatprep.subr.mxu0 0.0
        %1656 = vmatpush1.msra.mxu0 0.0
        %1657 = vmatprep.subr.mxu0 0.0
        %1658 = vmatpush1.msra.mxu0 0.0
        %1659 = vmatprep.subr.mxu0 0.0
        %1660 = vmatpush1.msra.mxu0 0.0
        %1661 = vmatprep.subr.mxu0 0.0
        %1662 = vmatpush1.msra.mxu0 0.0
        %1663 = vmatprep.subr.mxu0 0.0
        %1664 = vmatpush1.msra.mxu0 0.0
        %1665 = vmatprep.subr.mxu0 0.0
        %1666 = vmatpush1.msra.mxu0 0.0
        %1667 = vmatprep.subr.mxu0 0.0
        %1668 = vmatpush1.msra.mxu0 0.0
        %1669 = vmatprep.subr.mxu0 0.0
        %1670 = vmatpush1.msra.mxu0 0.0
        %1671 = vmatprep.subr.mxu0 0.0
        %1672 = vmatpush1.msra.mxu0 0.0
        %1673 = vmatprep.subr.mxu0 0.0
        %1674 = vmatpush1.msra.mxu0 0.0
        %1675 = vmatprep.mubr.f32.mxu0 0.0
        %1676 = vmatmul.mubr.f32.gmra.mrb[0].mxu0 %v1585
        %v1677 = vpop.f32.mrb[0].mxu0
        %v1678 = vadd.f32 0.0, %v1677
        %v1679 = vpop.f32.mrb[0].mxu0
        %1680 = vmatprep.mubr.f32.mxu0 0.0
        %1681 = vmatmul.mubr.f32.gmra.mrb[0].mxu0 %v1588
        %v1682 = vpop.f32.mrb[0].mxu0
        %v1683 = vadd.f32 0.0, %v1682
        %v1684 = vpop.f32.mrb[0].mxu0
        %1685 = vmatprep.mubr.f32.mxu0 0.0
        %1686 = vmatmul.mubr.f32.gmra.mrb[0].mxu0 %v1591
        %v1687 = vpop.f32.mrb[0].mxu0
        %v1688 = vadd.f32 0.0, %v1687
        %v1689 = vpop.f32.mrb[0].mxu0
        %1690 = vmatprep.mubr.f32.mxu0 0.0
        %1691 = vmatmul.mubr.f32.gmra.mrb[0].mxu0 %v1594
        %v1692 = vpop.f32.mrb[0].mxu0
        %v1693 = vadd.f32 0.0, %v1692
        %v1694 = vpop.f32.mrb[0].mxu0
        %1695 = vmatprep.mubr.f32.mxu0 0.0
        %1696 = vmatmul.mubr.f32.gmra.mrb[0].mxu0 %v1597
        %v1697 = vpop.f32.mrb[0].mxu0
        %v1698 = vadd.f32 0.0, %v1697
        %v1699 = vpop.f32.mrb[0].mxu0
        %1700 = vmatprep.mubr.f32.mxu0 0.0
        %1701 = vmatmul.mubr.f32.gmra.mrb[0].mxu0 %v1600
        %v1702 = vpop.f32.mrb[0].mxu0
        %v1703 = vadd.f32 0.0, %v1702
        %v1704 = vpop.f32.mrb[0].mxu0
        %1705 = vmatprep.mubr.f32.mxu0 0.0
        %1706 = vmatmul.mubr.f32.gmra.mrb[0].mxu0 %v1603
        %v1707 = vpop.f32.mrb[0].mxu0
        %v1708 = vadd.f32 0.0, %v1707
        %v1709 = vpop.f32.mrb[0].mxu0
        %1710 = vmatprep.mubr.f32.mxu0 0.0
        %1711 = vmatmul.mubr.f32.gmra.mrb[0].mxu0 %v1606
        %v1712 = vpop.f32.mrb[0].mxu0
        %v1713 = vadd.f32 0.0, %v1712
        %v1714 = vpop.f32.mrb[0].mxu0
        %1715 = vdwg.mxu0
        %v1716 = vadd.f32 %v1566, %v1678
        %v1717 = vadd.f32 %v1567, %v1683
        %v1718 = vadd.f32 %v1568, %v1688
        %v1719 = vadd.f32 %v1569, %v1693
        %v1720 = vadd.f32 %v1570, %v1698
        %v1721 = vadd.f32 %v1571, %v1703
        %v1722 = vadd.f32 %v1572, %v1708
        %v1723 = vadd.f32 %v1573, %v1713
        %vm1724 = vcmask 64512
        %1725 = vst.msk [vmem:[%s251] sm:$0xff] %vm1724, %v1716
        %1726 = vst.msk [vmem:[%s251 + $0x8] sm:$0xff] %vm1724, %v1717
        %1727 = vst.msk [vmem:[%s251 + $0x10] sm:$0xff] %vm1724, %v1718
        %1728 = vst.msk [vmem:[%s251 + $0x18] sm:$0xff] %vm1724, %v1719
        %1729 = vst.msk [vmem:[%s251 + $0x20] sm:$0xff] %vm1724, %v1720
        %1730 = vst.msk [vmem:[%s251 + $0x28] sm:$0xff] %vm1724, %v1721
        %1731 = vst.msk [vmem:[%s251 + $0x30] sm:$0xff] %vm1724, %v1722
        %1732 = vst.msk [vmem:[%s251 + $0x38] sm:$0xff] %vm1724, %v1723
        // Predicated region
        $region41: #{tpu_custom_call.1} parent=27 // pred_check
          %p1733 = pneg %p266
        $region42: #{tpu_custom_call.1} parent=27 // pred_check_branch
          %1735 = sbr.rel (%p1733) target = $region44
        $region43: #{tpu_custom_call.1} parent=27 // pred_region
          %vm1736 = vcmask 57344
          %1737 = vst.msk [vmem:[%s257] sm:$0x1] %vm1736, 0.0
          %1738 = vst.msk [vmem:[%s263] sm:$0x1] %vm1736, 0.0
        $region44: #{tpu_custom_call.1} parent=27 // pred_fallthru
          _
        %v1739 = vld [vmem:[%s257] sm:$0x1]
        %v1740 = vsel %vm1724, %v1716, 0.0
        %v1741 = vsel %vm1724, %v1717, 0.0
        %v1742 = vadd.f32 %v1740, %v1741
        %v1743 = vsel %vm1724, %v1718, 0.0
        %v1744 = vadd.f32 %v1742, %v1743
        %v1745 = vsel %vm1724, %v1719, 0.0
        %v1746 = vadd.f32 %v1744, %v1745
        %v1747 = vsel %vm1724, %v1720, 0.0
        %v1748 = vadd.f32 %v1746, %v1747
        %v1749 = vsel %vm1724, %v1721, 0.0
        %v1750 = vadd.f32 %v1748, %v1749
        %v1751 = vsel %vm1724, %v1722, 0.0
        %v1752 = vadd.f32 %v1750, %v1751
        %v1753 = vsel %vm1724, %v1723, 0.0
        %v1754 = vadd.f32 %v1752, %v1753
        %v1755 = vrot.slane %v1754, 4
        %v1756 = vadd.f32 %v1754, %v1755
        %v1757 = vrot.slane %v1756, 2
        %v1758 = vadd.f32 %v1756, %v1757
        %v1759 = vrot.slane %v1758, 1
        %v1760 = vadd.f32 %v1758, %v1759
        %v1761 = vadd.f32 %v1739, %v1760
        %vm1762 = vcmask 57344
        %1763 = vst.msk [vmem:[%s257] sm:$0x1] %vm1762, %v1761
        %v1764 = vld [vmem:[%s263] sm:$0x1]
        %v1765 = vmul.f32 %v1716, %v1716
        %v1766 = vmul.f32 %v1717, %v1717
        %v1767 = vmul.f32 %v1718, %v1718
        %v1768 = vmul.f32 %v1719, %v1719
        %v1769 = vmul.f32 %v1720, %v1720
        %v1770 = vmul.f32 %v1721, %v1721
        %v1771 = vmul.f32 %v1722, %v1722
        %v1772 = vmul.f32 %v1723, %v1723
        %v1773 = vsel %vm1724, %v1765, 0.0
        %v1774 = vsel %vm1724, %v1766, 0.0
        %v1775 = vadd.f32 %v1773, %v1774
        %v1776 = vsel %vm1724, %v1767, 0.0
        %v1777 = vadd.f32 %v1775, %v1776
        %v1778 = vsel %vm1724, %v1768, 0.0
        %v1779 = vadd.f32 %v1777, %v1778
        %v1780 = vsel %vm1724, %v1769, 0.0
        %v1781 = vadd.f32 %v1779, %v1780
        %v1782 = vsel %vm1724, %v1770, 0.0
        %v1783 = vadd.f32 %v1781, %v1782
        %v1784 = vsel %vm1724, %v1771, 0.0
        %v1785 = vadd.f32 %v1783, %v1784
        %v1786 = vsel %vm1724, %v1772, 0.0
        %v1787 = vadd.f32 %v1785, %v1786
        %v1788 = vrot.slane %v1787, 4
        %v1789 = vadd.f32 %v1787, %v1788
        %v1790 = vrot.slane %v1789, 2
        %v1791 = vadd.f32 %v1789, %v1790
        %v1792 = vrot.slane %v1791, 1
        %v1793 = vadd.f32 %v1791, %v1792
        %v1794 = vadd.f32 %v1764, %v1793
        %1795 = vst.msk [vmem:[%s263] sm:$0x1] %vm1762, %v1794
        %s1796 = sand.u32 %s97, 1
        %s1797 = scalar_lea.sflag [#allocation5], %s1796
        %s1798 = sand.u32 %s97, 1
        %s1799 = smul.addr %s1798, 64
        %s1800 = scalar_lea.vmem [#allocation8], %s1799
        %s1801 = sand.u32 %s26, 1
        %s1802 = scalar_lea.sflag [#allocation10], %s1801
        %s1803 = sand.u32 %s123, 1
        %s1804 = scalar_lea.vmem [#allocation9], %s1803
        %s1805 = sand.u32 %s26, 1
        %s1806 = scalar_lea.sflag [#allocation10], %s1805
        %s1807 = sand.u32 %s149, 1
        %s1808 = scalar_lea.vmem [#allocation11], %s1807
        // Predicated region
        $region45: #{tpu_custom_call.1} parent=27 // pred_check
          %p1809 = pneg %p107
        $region46: #{tpu_custom_call.1} parent=27 // pred_check_branch
          %1811 = sbr.rel (%p1809) target = $region48
        $region47: #{tpu_custom_call.1} parent=27 // pred_region
          %s1812 = sadd.s32 %s30, %s31
          %s1814 = ssub.s32 1024, 1024
          %1815 = vsyncadd %s1797, %s1814
          %s1816 = smul.addr %s1812, 8
          %s1817 = smul.addr %s1816, 128
          %s1818 = scalar_lea.hbm %s2, %s1817
          %s1819 = sshll.u32 %s1800, 4
          %s1820 = int_to_ptr.vmem [resolvable:$true] %s1819
          %1825 = dma.vmem_to_hbm [thread:$0]  %s1820, 1024, %s1818, %s1797, 128, 128, 8
        $region48: #{tpu_custom_call.1} parent=27 // pred_fallthru
          _
        // Predicated region
        $region49: #{tpu_custom_call.1} parent=27 // pred_check
          %p1826 = pneg %p133
        $region50: #{tpu_custom_call.1} parent=27 // pred_check_branch
          %1828 = sbr.rel (%p1826) target = $region52
        $region51: #{tpu_custom_call.1} parent=27 // pred_region
          %s1830 = ssub.s32 16, 16
          %1831 = vsyncadd %s1802, %s1830
          %s1832 = smul.addr %s30, 16
          %s1833 = scalar_lea.hbm %s3, %s1832
          %s1835 = sshll.u32 %s1804, 4
          %s1836 = int_to_ptr.vmem [resolvable:$true] %s1835
          %1838 = dma.vmem_to_hbm [thread:$0]  %s1836, 16, %s1833, %s1802
        $region52: #{tpu_custom_call.1} parent=27 // pred_fallthru
          _
        // Predicated region
        $region53: #{tpu_custom_call.1} parent=27 // pred_check
          %p1839 = pneg %p159
        $region54: #{tpu_custom_call.1} parent=27 // pred_check_branch
          %1841 = sbr.rel (%p1839) target = $region56
        $region55: #{tpu_custom_call.1} parent=27 // pred_region
          %s1843 = ssub.s32 16, 16
          %1844 = vsyncadd %s1806, %s1843
          %s1845 = smul.addr %s30, 16
          %s1846 = scalar_lea.hbm %s4, %s1845
          %s1848 = sshll.u32 %s1808, 4
          %s1849 = int_to_ptr.vmem [resolvable:$true] %s1848
          %1851 = dma.vmem_to_hbm [thread:$0]  %s1849, 16, %s1846, %s1806
        $region56: #{tpu_custom_call.1} parent=27 // pred_fallthru
          _
      $region28: #{tpu_custom_call.1} parent=5 // pred_fallthru
        _
      %p1852 = scmp.le.s32.totalorder 2, %s21
      // Predicated region
      $region57: #{tpu_custom_call.1} parent=5 // pred_check
        %p1853 = pneg %p1852
      $region58: #{tpu_custom_call.1} parent=5 // pred_check_branch
        %1855 = sbr.rel (%p1853) target = $region60
      $region59: #{tpu_custom_call.1} parent=5 // pred_region
        %s1856 = ssub.s32 %s21, 2
        // Predicated region
        $region61: #{tpu_custom_call.1} parent=59 // pred_check
          %p1857 = pneg %p113
        $region62: #{tpu_custom_call.1} parent=59 // pred_check_branch
          %1859 = sbr.rel (%p1857) target = $region64
        $region63: #{tpu_custom_call.1} parent=59 // pred_region
          %s1860 = sand.u32 %s98, 1
          %s1861 = scalar_lea.sflag [#allocation5], %s1860
          %s1862 = sand.u32 %s98, 1
          %s1863 = smul.addr %s1862, 64
          %s1864 = scalar_lea.vmem [#allocation8], %s1863
          %1865 = dma.done %s1861, 1024
        $region64: #{tpu_custom_call.1} parent=59 // pred_fallthru
          _
        // Predicated region
        $region65: #{tpu_custom_call.1} parent=59 // pred_check
          %p1866 = pneg %p139
        $region66: #{tpu_custom_call.1} parent=59 // pred_check_branch
          %1868 = sbr.rel (%p1866) target = $region68
        $region67: #{tpu_custom_call.1} parent=59 // pred_region
          %s1869 = sand.u32 %s27, 1
          %s1870 = scalar_lea.sflag [#allocation10], %s1869
          %s1871 = sand.u32 %s124, 1
          %s1872 = scalar_lea.vmem [#allocation9], %s1871
          %1873 = dma.done %s1870, 16
        $region68: #{tpu_custom_call.1} parent=59 // pred_fallthru
          _
        // Predicated region
        $region69: #{tpu_custom_call.1} parent=59 // pred_check
          %p1874 = pneg %p165
        $region70: #{tpu_custom_call.1} parent=59 // pred_check_branch
          %1876 = sbr.rel (%p1874) target = $region72
        $region71: #{tpu_custom_call.1} parent=59 // pred_region
          %s1877 = sand.u32 %s27, 1
          %s1878 = scalar_lea.sflag [#allocation10], %s1877
          %s1879 = sand.u32 %s150, 1
          %s1880 = scalar_lea.vmem [#allocation11], %s1879
          %1881 = dma.done %s1878, 16
        $region72: #{tpu_custom_call.1} parent=59 // pred_fallthru
          _
      $region60: #{tpu_custom_call.1} parent=5 // pred_fallthru
        _
    $region6: #{tpu_custom_call.1} parent=1 // loop_footer
      %s25 = sadd.s32 1, %s21
    $region7: #{tpu_custom_call.1} parent=1 // loop_footer_branch
      %20 = sbr.rel target = $region3
    $region8: #{tpu_custom_call.1} parent=1 // loop_exit
      _
    %1882 = vsyncpa [#allocation4], 1
    %s1883 = scalar_lea.sflag [#allocation4], 1
    %1884 = vsyncpa %s1883, 1
    %1885 = vsyncpa [#allocation7], 1
    %1886 = vsyncpa [#allocation5], 1
    %s1887 = scalar_lea.sflag [#allocation5], 1
    %1888 = vsyncpa %s1887, 1
    %1889 = vsyncpa [#allocation10], 1
    %s1890 = scalar_lea.sflag [#allocation10], 1
    %1891 = vsyncpa %s1890, 1

</llo_original>
